<compile_context>
chip_gen: v7x
topology: tpu7x:2x2x1
jax: 0.10.0
libtpu: 0.0.40
codegen_flags: <defaults>
</compile_context>

<pallas_src>
import functools

import jax
import jax.numpy as jnp
import numpy as np
from jax.experimental import pallas as pl
from jax.experimental.pallas import tpu as pltpu

C_IN = 12      # concatenated input channels
C_MID = 64     # ConvBlock output channels
C2_PAD = 16    # conv2 per-tap output channels, padded 12 -> 16 (sublane align)
BN_EPS = 1e-5


def _tree_sum(vals):
    """Balanced pairwise-tree sum (shorter VPU dependency chain)."""
    vals = list(vals)
    while len(vals) > 1:
        nxt = [vals[i] + vals[i + 1] for i in range(0, len(vals) - 1, 2)]
        if len(vals) % 2:
            nxt.append(vals[-1])
        vals = nxt
    return vals[0]


def _ffm_kernel(cur_ref, prev_ref, nxt_ref, masks_ref,
                w1k_ref, b1_ref, w2k_ref, b2_ref, wc_ref, bc_ref,
                out_ref, *, Hs, W):
    """One (batch, row-strip) step.

    cur/prev/nxt_ref : (1, 1, 12, Hs*W)  current / neighbour feature strips
    masks_ref        : (4, (Hs+4)*W)     {x!=0, x!=W-1, row==1, row==Hs+2}
    w1k_ref          : (9*64, 12) bf16   conv1 kn2row weights (BN folded)
    b1_ref           : (64, 1)  f32      conv1 (folded BN) bias
    w2k_ref          : (9*16, 64) bf16   conv2 kn2row weights (BN folded,
                                         tap out-channels zero padded 12->16)
    b2_ref           : (12, 1)  f32      conv2 (folded BN) bias
    wc_ref, bc_ref   : (NC, 12), (NC, 1) final 1x1 conv
    out_ref          : (1, NC, Hs*W)     lane-dense output strip
    """
    s = pl.program_id(1)
    n_s = pl.num_programs(1)
    LO = Hs * W          # output strip flat length
    L1 = (Hs + 4) * W    # extended x1 flat length (1-row halo + slack rows)

    cur = cur_ref[0, 0]                        # (12, Hs*W) f32
    prev = prev_ref[0, 0]
    nxt = nxt_ref[0, 0]

    # scalar strip-boundary indicators as f32 (no vector i1 selects needed)
    isf = jnp.where(s == 0, 1.0, 0.0)
    isl = jnp.where(s == n_s - 1, 1.0, 0.0)

    # ---- conv1 source, flattened with stride W, channels in sublanes ------
    # rows: [0,1] slack, [2,3] top halo, [4..Hs+3] strip,
    #       [Hs+4,Hs+5] bottom halo, [Hs+6,Hs+7] slack
    zero2 = jnp.zeros((C_IN, 2 * W), jnp.float32)
    top = prev[:, (Hs - 2) * W:] * (1.0 - isf)       # zero at image top
    bot = nxt[:, :2 * W] * (1.0 - isl)               # zero at image bottom
    fsrc = jnp.concatenate([zero2, top, cur, bot, zero2], axis=1)

    m = masks_ref[...]
    m_ne0 = m[0:1, :]            # 0.0 where x == 0     (left-edge wrap)
    m_neW = m[1:2, :]            # 0.0 where x == W-1   (right-edge wrap)
    row1 = m[2:3, :]             # 1.0 on x1 row 1      (image row r0-1)
    rowH = m[3:4, :]             # 1.0 on x1 row Hs+2   (image row r0+Hs)

    # ---- conv3x3 (12 -> 64) + folded BN: one matmul + 9 shifted adds ------
    p1 = jnp.dot(w1k_ref[...], fsrc.astype(jnp.bfloat16),
                 preferred_element_type=jnp.float32)        # (576, (Hs+8)*W)
    taps = []
    for dy in range(3):
        for dx in range(3):
            t = dy * 3 + dx
            sh = (dy + 1) * W + dx - 1
            sl = p1[t * C_MID:(t + 1) * C_MID, sh:sh + L1]
            if dx == 0:
                sl = sl * m_ne0
            elif dx == 2:
                sl = sl * m_neW
            taps.append(sl)
    x1 = jnp.maximum(_tree_sum(taps) + b1_ref[...], 0.0)    # (64, L1)

    # zero the out-of-image halo rows (conv2's 'same' zero padding) on the
    # first / last strip; interior strips keep the recomputed neighbour rows.
    keep = 1.0 - row1 * isf - rowH * isl
    x1src = (x1 * keep).astype(jnp.bfloat16)

    # ---- conv3x3 (64 -> 12) + folded BN ------------------------------------
    p2 = jnp.dot(w2k_ref[...], x1src,
                 preferred_element_type=jnp.float32)        # (144, L1)
    taps = []
    for dy in range(3):
        for dx in range(3):
            t = dy * 3 + dx
            sh = (dy + 1) * W + dx - 1
            sl = p2[t * C2_PAD:t * C2_PAD + C_IN, sh:sh + LO]
            if dx == 0:
                sl = sl * m_ne0[:, :LO]
            elif dx == 2:
                sl = sl * m_neW[:, :LO]
            taps.append(sl)
    acc2 = _tree_sum(taps)                                  # (12, LO)

    # ---- residual add + ReLU + 1x1 conv (lane-dense output) ---------------
    x2 = jnp.maximum(acc2 + b2_ref[...] + cur, 0.0)         # (12, LO)
    out = jnp.dot(wc_ref[...], x2,
                  preferred_element_type=jnp.float32) + bc_ref[...]
    out_ref[0] = out.astype(out_ref.dtype)                  # (NC, LO)


def _vmem_estimate(Hs, W):
    lf = (Hs + 8) * W
    l1 = (Hs + 4) * W
    b = 4 * 9 * C_MID * lf              # p1 (f32)
    b += 4 * 9 * C2_PAD * l1            # p2 (f32)
    b += (4 + 4 + 2) * C_MID * l1       # x1 / x1src (f32 + bf16)
    b += (4 + 2) * C_IN * lf            # fsrc (f32 + bf16)
    b += 4 * (3 * C_IN + 16) * Hs * W   # strip I/O + misc
    return int(1.6 * b)


def _pick_strip_rows(H, W, budget_bytes=12 << 20):
    """Largest row-strip dividing H whose intermediates fit the VMEM budget
    and whose output block stays lane-aligned (Hs*W % 128 == 0)."""
    for Hs in sorted((d for d in range(2, H + 1) if H % d == 0), reverse=True):
        S = H // Hs
        if S > 1 and (Hs * W) % 128 != 0:
            continue
        if _vmem_estimate(Hs, W) <= budget_bytes:
            return Hs
    # TODO(synk): add a W-direction strip / spatial-pad path for images where
    # no 128-aligned row strip fits the VMEM budget.
    return H


def feature_fusion_forward(input_1, input_2, params, num_classes,
                           strip_rows=None):
    """input_1, input_2: NCHW float32 arrays whose channels sum to 12."""
    N, c1, H, W = input_1.shape
    if c1 + input_2.shape[1] != C_IN:
        raise ValueError("input channels must sum to 12")
    feature = jnp.concatenate([input_1, input_2], axis=1)     # (N, 12, H, W)

    Hs = _pick_strip_rows(H, W) if strip_rows is None else int(strip_rows)
    if H % Hs != 0 or Hs < 2:
        raise ValueError("strip_rows must divide H and be >= 2")
    S = H // Hs
    if S > 1 and (Hs * W) % 128 != 0:
        raise ValueError("Hs*W must be a multiple of 128 when using >1 strip")

    # (N, 12, H, W) -> (N, S, 12, Hs*W): strips as a leading block axis so all
    # in-kernel slicing is static (halo rows come from clamped prev/next
    # strip blocks).
    feat_s = jnp.transpose(feature.reshape(N, C_IN, S, Hs * W), (0, 2, 1, 3))

    # host-precomputed {0,1} masks: column-wrap fix + halo-row indicators
    L1 = (Hs + 4) * W
    xs = np.arange(L1) % W
    rs = np.arange(L1) // W
    masks = jnp.asarray(np.stack([xs != 0, xs != W - 1,
                                  rs == 1, rs == Hs + 2]).astype(np.float32))

    vmem_limit = int(min(max(2 * _vmem_estimate(Hs, W), 32 << 20), 64 << 20))
    kernel = functools.partial(_ffm_kernel, Hs=Hs, W=W)

    out_flat = pl.pallas_call(
        kernel,
        out_shape=jax.ShapeDtypeStruct((N, num_classes, H * W), jnp.float32),
        grid_spec=pltpu.PrefetchScalarGridSpec(
            num_scalar_prefetch=0,
            grid=(N, S),
            in_specs=[
                pl.BlockSpec((1, 1, C_IN, Hs * W),
                             lambda n, s: (n, s, 0, 0)),
                pl.BlockSpec((1, 1, C_IN, Hs * W),
                             lambda n, s: (n, jnp.maximum(s - 1, 0), 0, 0)),
                pl.BlockSpec((1, 1, C_IN, Hs * W),
                             lambda n, s: (n, jnp.minimum(s + 1, S - 1), 0, 0)),
                pl.BlockSpec((4, L1), lambda n, s: (0, 0)),
                pl.BlockSpec((9 * C_MID, C_IN), lambda n, s: (0, 0)),
                pl.BlockSpec((C_MID, 1), lambda n, s: (0, 0)),
                pl.BlockSpec((9 * C2_PAD, C_MID), lambda n, s: (0, 0)),
                pl.BlockSpec((C_IN, 1), lambda n, s: (0, 0)),
                pl.BlockSpec((num_classes, C_IN), lambda n, s: (0, 0)),
                pl.BlockSpec((num_classes, 1), lambda n, s: (0, 0)),
            ],
            out_specs=pl.BlockSpec((1, num_classes, Hs * W),
                                   lambda n, s: (n, 0, s)),
        ),
        compiler_params=pltpu.CompilerParams(
            dimension_semantics=("parallel", "parallel"),
            vmem_limit_bytes=vmem_limit),
    )(feat_s, feat_s, feat_s, masks,
      params["w1k"], params["b1"], params["w2k"], params["b2"],
      params["wc"], params["bc"])
    # (N, NC, H*W) -> (N, NC, H, W): contiguous reshape, no transpose.
    return out_flat.reshape(N, num_classes, H, W)


def make_params(num_classes, key):
    """Deterministic synthetic parameters (shapes match the PyTorch module)."""
    ks = jax.random.split(key, 6)

    def bn_fold(kg, c):
        k1, k2, k3, k4 = jax.random.split(kg, 4)
        gamma = 1.0 + 0.1 * jax.random.normal(k1, (c,), jnp.float32)
        beta = 0.1 * jax.random.normal(k2, (c,), jnp.float32)
        mean = 0.1 * jax.random.normal(k3, (c,), jnp.float32)
        var = jnp.abs(jax.random.normal(k4, (c,), jnp.float32)) + 0.5
        scale = gamma / jnp.sqrt(var + BN_EPS)
        return scale, beta - mean * scale

    w1_hwio = 0.1 * jax.random.normal(ks[0], (3, 3, C_IN, C_MID), jnp.float32)
    w3_hwio = 0.1 * jax.random.normal(ks[1], (3, 3, C_MID, C_IN), jnp.float32)
    wc = 0.1 * jax.random.normal(ks[2], (num_classes, C_IN), jnp.float32)
    bc = 0.1 * jax.random.normal(ks[3], (num_classes,), jnp.float32)
    s1, b1 = bn_fold(ks[4], C_MID)
    s3, b3 = bn_fold(ks[5], C_IN)

    # fold eval-mode BN scales into the conv weights
    w1f = w1_hwio * s1[None, None, None, :]               # (3,3,12,64)
    w3f = w3_hwio * s3[None, None, None, :]               # (3,3,64,12)

    # kn2row weight matrices, channels-first:
    #   w1k[(dy*3+dx)*64 + o, c] = w1f[dy, dx, c, o]
    #   w2k[(dy*3+dx)*16 + o, c] = w3f[dy, dx, c, o]   (o padded 12 -> 16)
    w1k = jnp.transpose(w1f, (0, 1, 3, 2)).reshape(9 * C_MID, C_IN)
    w2k = jnp.pad(jnp.transpose(w3f, (0, 1, 3, 2)),
                  ((0, 0), (0, 0), (0, C2_PAD - C_IN), (0, 0)))
    w2k = w2k.reshape(9 * C2_PAD, C_MID)

    return {
        # kernel-side parameters (conv weights in bf16 for the MXU)
        "w1k": w1k.astype(jnp.bfloat16),
        "b1": b1.reshape(C_MID, 1),
        "w2k": w2k.astype(jnp.bfloat16),
        "b2": b3.reshape(C_IN, 1),
        "wc": wc,
        "bc": bc.reshape(num_classes, 1),
        # reference-side copies (same folded weights, same bf16 rounding)
        "w1f_bf16": w1f.astype(jnp.bfloat16),
        "w3f_bf16": w3f.astype(jnp.bfloat16),
        "b1v": b1, "b3v": b3, "wc_f32": wc, "bc_v": bc,
    }


def reference_forward(input_1, input_2, params, num_classes):
    """Pure-JAX reference (lax.conv) with the same bf16 matmul inputs."""
    feature = jnp.concatenate([input_1, input_2], axis=1)    # NCHW
    x = jnp.transpose(feature, (0, 2, 3, 1))                 # NHWC
    dn = ("NHWC", "HWIO", "NHWC")

    def conv(v, w):
        return jax.lax.conv_general_dilated(
            v.astype(jnp.bfloat16), w, (1, 1), "SAME",
            dimension_numbers=dn, preferred_element_type=jnp.float32)

    h = jnp.maximum(conv(x, params["w1f_bf16"]) + params["b1v"], 0.0)
    h = conv(h, params["w3f_bf16"]) + params["b3v"]
    h = jnp.maximum(h + x, 0.0)
    h = jnp.einsum("nhwc,oc->nhwo", h, params["wc_f32"]) + params["bc_v"]
    return jnp.transpose(h, (0, 3, 1, 2))


if __name__ == "__main__":
    num_classes = 8
    N, H, W = 2, 16, 16

    key = jax.random.PRNGKey(0)
    k_in1, k_in2, k_par = jax.random.split(key, 3)
    input_1 = jax.random.normal(k_in1, (N, 6, H, W), jnp.float32)   # NCHW
    input_2 = jax.random.normal(k_in2, (N, 6, H, W), jnp.float32)   # NCHW
    params = make_params(num_classes, k_par)

    out = jax.block_until_ready(
        feature_fusion_forward(input_1, input_2, params, num_classes,
                               strip_rows=8))   # 2 row strips -> exercises halo
    ref = jax.block_until_ready(
        reference_forward(input_1, input_2, params, num_classes))
    np.testing.assert_allclose(np.asarray(out), np.asarray(ref),
                               rtol=5e-3, atol=5e-3)

    print("KERNEL_OK")
</pallas_src>

<mosaic_0001>
module attributes {stable_mosaic.version = 11 : i64} {
  func.func @_ffm_kernel(%arg0: i32, %arg1: i32, %arg2: memref<1x1x12x128xf32, #tpu.memory_space<vmem>>, %arg3: memref<1x1x12x128xf32, #tpu.memory_space<vmem>>, %arg4: memref<1x1x12x128xf32, #tpu.memory_space<vmem>>, %arg5: memref<4x192xf32, #tpu.memory_space<vmem>>, %arg6: memref<576x12xbf16, #tpu.memory_space<vmem>>, %arg7: memref<64x1xf32, #tpu.memory_space<vmem>>, %arg8: memref<144x64xbf16, #tpu.memory_space<vmem>>, %arg9: memref<12x1xf32, #tpu.memory_space<vmem>>, %arg10: memref<8x12xf32, #tpu.memory_space<vmem>>, %arg11: memref<8x1xf32, #tpu.memory_space<vmem>>, %arg12: memref<1x8x128xf32, #tpu.memory_space<vmem>>) attributes {dimension_semantics = [#tpu.dimension_semantics<parallel>, #tpu.dimension_semantics<parallel>], iteration_bounds = array<i64: 2, 2>, scalar_prefetch = 0 : i64, scratch_operands = 0 : i64, tpu.core_type = #tpu.core_type<tc>, window_params = [{transform_indices = @transform_0, window_bounds = array<i64: 1, 1, 12, 128>}, {transform_indices = @transform_1, window_bounds = array<i64: 1, 1, 12, 128>}, {transform_indices = @transform_2, window_bounds = array<i64: 1, 1, 12, 128>}, {pipeline_mode = #tpu.pipeline_mode<synchronous>, transform_indices = @transform_3, window_bounds = array<i64: 4, 192>}, {pipeline_mode = #tpu.pipeline_mode<synchronous>, transform_indices = @transform_4, window_bounds = array<i64: 576, 12>}, {pipeline_mode = #tpu.pipeline_mode<synchronous>, transform_indices = @transform_5, window_bounds = array<i64: 64, 1>}, {pipeline_mode = #tpu.pipeline_mode<synchronous>, transform_indices = @transform_6, window_bounds = array<i64: 144, 64>}, {pipeline_mode = #tpu.pipeline_mode<synchronous>, transform_indices = @transform_7, window_bounds = array<i64: 12, 1>}, {pipeline_mode = #tpu.pipeline_mode<synchronous>, transform_indices = @transform_8, window_bounds = array<i64: 8, 12>}, {pipeline_mode = #tpu.pipeline_mode<synchronous>, transform_indices = @transform_9, window_bounds = array<i64: 8, 1>}, {transform_indices = @transform_10, window_bounds = array<i64: 1, 8, 128>}]} {
    %c0 = arith.constant 0 : index
    %c0_0 = arith.constant 0 : index
    %c0_1 = arith.constant 0 : index
    %c0_2 = arith.constant 0 : index
    %0 = vector.load %arg2[%c0, %c0_0, %c0_1, %c0_2] : memref<1x1x12x128xf32, #tpu.memory_space<vmem>>, vector<1x1x12x128xf32>
    %1 = vector.shape_cast %0 : vector<1x1x12x128xf32> to vector<12x128xf32>
    %c0_3 = arith.constant 0 : index
    %c0_4 = arith.constant 0 : index
    %c0_5 = arith.constant 0 : index
    %c0_6 = arith.constant 0 : index
    %2 = vector.load %arg3[%c0_3, %c0_4, %c0_5, %c0_6] : memref<1x1x12x128xf32, #tpu.memory_space<vmem>>, vector<1x1x12x128xf32>
    %3 = vector.shape_cast %2 : vector<1x1x12x128xf32> to vector<12x128xf32>
    %c0_7 = arith.constant 0 : index
    %c0_8 = arith.constant 0 : index
    %c0_9 = arith.constant 0 : index
    %c0_10 = arith.constant 0 : index
    %4 = vector.load %arg4[%c0_7, %c0_8, %c0_9, %c0_10] : memref<1x1x12x128xf32, #tpu.memory_space<vmem>>, vector<1x1x12x128xf32>
    %5 = vector.shape_cast %4 : vector<1x1x12x128xf32> to vector<12x128xf32>
    %c0_i32 = arith.constant 0 : i32
    %6 = arith.cmpi eq, %arg1, %c0_i32 : i32
    %cst = arith.constant 1.000000e+00 : f32
    %cst_11 = arith.constant 0.000000e+00 : f32
    %7 = arith.select %6, %cst, %cst_11 : f32
    %c1_i32 = arith.constant 1 : i32
    %8 = arith.cmpi eq, %arg1, %c1_i32 : i32
    %cst_12 = arith.constant 1.000000e+00 : f32
    %cst_13 = arith.constant 0.000000e+00 : f32
    %9 = arith.select %8, %cst_12, %cst_13 : f32
    %cst_14 = arith.constant 0.000000e+00 : f32
    %10 = vector.broadcast %cst_14 : f32 to vector<12x32xf32>
    %11 = vector.extract_strided_slice %3 {offsets = [0, 96], sizes = [12, 32], strides = [1, 1]} : vector<12x128xf32> to vector<12x32xf32>
    %cst_15 = arith.constant 1.000000e+00 : f32
    %12 = arith.subf %cst_15, %7 : f32
    %13 = vector.broadcast %12 : f32 to vector<12x32xf32>
    %14 = arith.mulf %11, %13 : vector<12x32xf32>
    %15 = vector.extract_strided_slice %5 {offsets = [0, 0], sizes = [12, 32], strides = [1, 1]} : vector<12x128xf32> to vector<12x32xf32>
    %cst_16 = arith.constant 1.000000e+00 : f32
    %16 = arith.subf %cst_16, %9 : f32
    %17 = vector.broadcast %16 : f32 to vector<12x32xf32>
    %18 = arith.mulf %15, %17 : vector<12x32xf32>
    %19 = tpu.concatenate %10, %14, %1, %18, %10 in 1 : vector<12x32xf32>, vector<12x32xf32>, vector<12x128xf32>, vector<12x32xf32>, vector<12x32xf32> -> vector<12x256xf32>
    %c0_17 = arith.constant 0 : index
    %c0_18 = arith.constant 0 : index
    %20 = vector.load %arg5[%c0_17, %c0_18] : memref<4x192xf32, #tpu.memory_space<vmem>>, vector<4x192xf32>
    %21 = vector.extract_strided_slice %20 {offsets = [0, 0], sizes = [1, 192], strides = [1, 1]} : vector<4x192xf32> to vector<1x192xf32>
    %22 = vector.extract_strided_slice %20 {offsets = [1, 0], sizes = [1, 192], strides = [1, 1]} : vector<4x192xf32> to vector<1x192xf32>
    %23 = vector.extract_strided_slice %20 {offsets = [2, 0], sizes = [1, 192], strides = [1, 1]} : vector<4x192xf32> to vector<1x192xf32>
    %24 = vector.extract_strided_slice %20 {offsets = [3, 0], sizes = [1, 192], strides = [1, 1]} : vector<4x192xf32> to vector<1x192xf32>
    %c0_19 = arith.constant 0 : index
    %c0_20 = arith.constant 0 : index
    %25 = vector.load %arg6[%c0_19, %c0_20] : memref<576x12xbf16, #tpu.memory_space<vmem>>, vector<576x12xbf16>
    %26 = arith.truncf %19 : vector<12x256xf32> to vector<12x256xbf16>
    %cst_21 = arith.constant dense<0.000000e+00> : vector<576x256xf32>
    %27 = tpu.matmul %25, %26, %cst_21 {dimension_numbers = #tpu.dot_dimension_numbers<[1], [0], [0], [1], [0, 0, 1, 1], [], []>} : vector<576x12xbf16>, vector<12x256xbf16>, vector<576x256xf32> -> vector<576x256xf32>
    %28 = vector.extract_strided_slice %27 {offsets = [0, 15], sizes = [64, 192], strides = [1, 1]} : vector<576x256xf32> to vector<64x192xf32>
    %29 = vector.broadcast %21 : vector<1x192xf32> to vector<64x192xf32>
    %30 = arith.mulf %28, %29 : vector<64x192xf32>
    %31 = vector.extract_strided_slice %27 {offsets = [64, 16], sizes = [64, 192], strides = [1, 1]} : vector<576x256xf32> to vector<64x192xf32>
    %32 = vector.extract_strided_slice %27 {offsets = [128, 17], sizes = [64, 192], strides = [1, 1]} : vector<576x256xf32> to vector<64x192xf32>
    %33 = vector.broadcast %22 : vector<1x192xf32> to vector<64x192xf32>
    %34 = arith.mulf %32, %33 : vector<64x192xf32>
    %35 = vector.extract_strided_slice %27 {offsets = [192, 31], sizes = [64, 192], strides = [1, 1]} : vector<576x256xf32> to vector<64x192xf32>
    %36 = vector.broadcast %21 : vector<1x192xf32> to vector<64x192xf32>
    %37 = arith.mulf %35, %36 : vector<64x192xf32>
    %38 = vector.extract_strided_slice %27 {offsets = [256, 32], sizes = [64, 192], strides = [1, 1]} : vector<576x256xf32> to vector<64x192xf32>
    %39 = vector.extract_strided_slice %27 {offsets = [320, 33], sizes = [64, 192], strides = [1, 1]} : vector<576x256xf32> to vector<64x192xf32>
    %40 = vector.broadcast %22 : vector<1x192xf32> to vector<64x192xf32>
    %41 = arith.mulf %39, %40 : vector<64x192xf32>
    %42 = vector.extract_strided_slice %27 {offsets = [384, 47], sizes = [64, 192], strides = [1, 1]} : vector<576x256xf32> to vector<64x192xf32>
    %43 = vector.broadcast %21 : vector<1x192xf32> to vector<64x192xf32>
    %44 = arith.mulf %42, %43 : vector<64x192xf32>
    %45 = vector.extract_strided_slice %27 {offsets = [448, 48], sizes = [64, 192], strides = [1, 1]} : vector<576x256xf32> to vector<64x192xf32>
    %46 = vector.extract_strided_slice %27 {offsets = [512, 49], sizes = [64, 192], strides = [1, 1]} : vector<576x256xf32> to vector<64x192xf32>
    %47 = vector.broadcast %22 : vector<1x192xf32> to vector<64x192xf32>
    %48 = arith.mulf %46, %47 : vector<64x192xf32>
    %49 = arith.addf %30, %31 : vector<64x192xf32>
    %50 = arith.addf %34, %37 : vector<64x192xf32>
    %51 = arith.addf %38, %41 : vector<64x192xf32>
    %52 = arith.addf %44, %45 : vector<64x192xf32>
    %53 = arith.addf %49, %50 : vector<64x192xf32>
    %54 = arith.addf %51, %52 : vector<64x192xf32>
    %55 = arith.addf %53, %54 : vector<64x192xf32>
    %56 = arith.addf %55, %48 : vector<64x192xf32>
    %c0_22 = arith.constant 0 : index
    %c0_23 = arith.constant 0 : index
    %57 = vector.load %arg7[%c0_22, %c0_23] : memref<64x1xf32, #tpu.memory_space<vmem>>, vector<64x1xf32>
    %58 = vector.broadcast %57 : vector<64x1xf32> to vector<64x192xf32>
    %59 = arith.addf %56, %58 : vector<64x192xf32>
    %cst_24 = arith.constant 0.000000e+00 : f32
    %60 = vector.broadcast %cst_24 : f32 to vector<64x192xf32>
    %61 = arith.maximumf %59, %60 : vector<64x192xf32>
    %62 = vector.broadcast %7 : f32 to vector<1x192xf32>
    %63 = arith.mulf %23, %62 : vector<1x192xf32>
    %cst_25 = arith.constant 1.000000e+00 : f32
    %64 = vector.broadcast %cst_25 : f32 to vector<1x192xf32>
    %65 = arith.subf %64, %63 : vector<1x192xf32>
    %66 = vector.broadcast %9 : f32 to vector<1x192xf32>
    %67 = arith.mulf %24, %66 : vector<1x192xf32>
    %68 = arith.subf %65, %67 : vector<1x192xf32>
    %69 = vector.broadcast %68 : vector<1x192xf32> to vector<64x192xf32>
    %70 = arith.mulf %61, %69 : vector<64x192xf32>
    %71 = arith.truncf %70 : vector<64x192xf32> to vector<64x192xbf16>
    %c0_26 = arith.constant 0 : index
    %c0_27 = arith.constant 0 : index
    %72 = vector.load %arg8[%c0_26, %c0_27] : memref<144x64xbf16, #tpu.memory_space<vmem>>, vector<144x64xbf16>
    %cst_28 = arith.constant dense<0.000000e+00> : vector<144x192xf32>
    %73 = tpu.matmul %72, %71, %cst_28 {dimension_numbers = #tpu.dot_dimension_numbers<[1], [0], [0], [1], [0, 0, 1, 1], [], []>} : vector<144x64xbf16>, vector<64x192xbf16>, vector<144x192xf32> -> vector<144x192xf32>
    %74 = vector.extract_strided_slice %73 {offsets = [0, 15], sizes = [12, 128], strides = [1, 1]} : vector<144x192xf32> to vector<12x128xf32>
    %75 = vector.extract_strided_slice %21 {offsets = [0, 0], sizes = [1, 128], strides = [1, 1]} : vector<1x192xf32> to vector<1x128xf32>
    %76 = vector.broadcast %75 : vector<1x128xf32> to vector<12x128xf32>
    %77 = arith.mulf %74, %76 : vector<12x128xf32>
    %78 = vector.extract_strided_slice %73 {offsets = [16, 16], sizes = [12, 128], strides = [1, 1]} : vector<144x192xf32> to vector<12x128xf32>
    %79 = vector.extract_strided_slice %73 {offsets = [32, 17], sizes = [12, 128], strides = [1, 1]} : vector<144x192xf32> to vector<12x128xf32>
    %80 = vector.extract_strided_slice %22 {offsets = [0, 0], sizes = [1, 128], strides = [1, 1]} : vector<1x192xf32> to vector<1x128xf32>
    %81 = vector.broadcast %80 : vector<1x128xf32> to vector<12x128xf32>
    %82 = arith.mulf %79, %81 : vector<12x128xf32>
    %83 = vector.extract_strided_slice %73 {offsets = [48, 31], sizes = [12, 128], strides = [1, 1]} : vector<144x192xf32> to vector<12x128xf32>
    %84 = vector.extract_strided_slice %21 {offsets = [0, 0], sizes = [1, 128], strides = [1, 1]} : vector<1x192xf32> to vector<1x128xf32>
    %85 = vector.broadcast %84 : vector<1x128xf32> to vector<12x128xf32>
    %86 = arith.mulf %83, %85 : vector<12x128xf32>
    %87 = vector.extract_strided_slice %73 {offsets = [64, 32], sizes = [12, 128], strides = [1, 1]} : vector<144x192xf32> to vector<12x128xf32>
    %88 = vector.extract_strided_slice %73 {offsets = [80, 33], sizes = [12, 128], strides = [1, 1]} : vector<144x192xf32> to vector<12x128xf32>
    %89 = vector.extract_strided_slice %22 {offsets = [0, 0], sizes = [1, 128], strides = [1, 1]} : vector<1x192xf32> to vector<1x128xf32>
    %90 = vector.broadcast %89 : vector<1x128xf32> to vector<12x128xf32>
    %91 = arith.mulf %88, %90 : vector<12x128xf32>
    %92 = vector.extract_strided_slice %73 {offsets = [96, 47], sizes = [12, 128], strides = [1, 1]} : vector<144x192xf32> to vector<12x128xf32>
    %93 = vector.extract_strided_slice %21 {offsets = [0, 0], sizes = [1, 128], strides = [1, 1]} : vector<1x192xf32> to vector<1x128xf32>
    %94 = vector.broadcast %93 : vector<1x128xf32> to vector<12x128xf32>
    %95 = arith.mulf %92, %94 : vector<12x128xf32>
    %96 = vector.extract_strided_slice %73 {offsets = [112, 48], sizes = [12, 128], strides = [1, 1]} : vector<144x192xf32> to vector<12x128xf32>
    %97 = vector.extract_strided_slice %73 {offsets = [128, 49], sizes = [12, 128], strides = [1, 1]} : vector<144x192xf32> to vector<12x128xf32>
    %98 = vector.extract_strided_slice %22 {offsets = [0, 0], sizes = [1, 128], strides = [1, 1]} : vector<1x192xf32> to vector<1x128xf32>
    %99 = vector.broadcast %98 : vector<1x128xf32> to vector<12x128xf32>
    %100 = arith.mulf %97, %99 : vector<12x128xf32>
    %101 = arith.addf %77, %78 : vector<12x128xf32>
    %102 = arith.addf %82, %86 : vector<12x128xf32>
    %103 = arith.addf %87, %91 : vector<12x128xf32>
    %104 = arith.addf %95, %96 : vector<12x128xf32>
    %105 = arith.addf %101, %102 : vector<12x128xf32>
    %106 = arith.addf %103, %104 : vector<12x128xf32>
    %107 = arith.addf %105, %106 : vector<12x128xf32>
    %108 = arith.addf %107, %100 : vector<12x128xf32>
    %c0_29 = arith.constant 0 : index
    %c0_30 = arith.constant 0 : index
    %109 = vector.load %arg9[%c0_29, %c0_30] : memref<12x1xf32, #tpu.memory_space<vmem>>, vector<12x1xf32>
    %110 = vector.broadcast %109 : vector<12x1xf32> to vector<12x128xf32>
    %111 = arith.addf %108, %110 : vector<12x128xf32>
    %112 = arith.addf %111, %1 : vector<12x128xf32>
    %cst_31 = arith.constant 0.000000e+00 : f32
    %113 = vector.broadcast %cst_31 : f32 to vector<12x128xf32>
    %114 = arith.maximumf %112, %113 : vector<12x128xf32>
    %c0_32 = arith.constant 0 : index
    %c0_33 = arith.constant 0 : index
    %115 = vector.load %arg10[%c0_32, %c0_33] : memref<8x12xf32, #tpu.memory_space<vmem>>, vector<8x12xf32>
    %cst_34 = arith.constant dense<0.000000e+00> : vector<8x128xf32>
    %116 = tpu.matmul %115, %114, %cst_34 {dimension_numbers = #tpu.dot_dimension_numbers<[1], [0], [0], [1], [0, 0, 1, 1], [], []>} : vector<8x12xf32>, vector<12x128xf32>, vector<8x128xf32> -> vector<8x128xf32>
    %c0_35 = arith.constant 0 : index
    %c0_36 = arith.constant 0 : index
    %117 = vector.load %arg11[%c0_35, %c0_36] : memref<8x1xf32, #tpu.memory_space<vmem>>, vector<8x1xf32>
    %118 = vector.broadcast %117 : vector<8x1xf32> to vector<8x128xf32>
    %119 = arith.addf %116, %118 : vector<8x128xf32>
    %c0_37 = arith.constant 0 : index
    %c0_38 = arith.constant 0 : index
    %c0_39 = arith.constant 0 : index
    %120 = vector.load %arg12[%c0_37, %c0_38, %c0_39] : memref<1x8x128xf32, #tpu.memory_space<vmem>>, vector<1x8x128xf32>
    %121 = vector.shape_cast %120 : vector<1x8x128xf32> to vector<8x128xf32>
    %122 = vector.shape_cast %119 : vector<8x128xf32> to vector<1x8x128xf32>
    tpu.vector_store %arg12[%c0_37, %c0_38, %c0_39], %122 {strides = array<i32>} : memref<1x8x128xf32, #tpu.memory_space<vmem>>, vector<1x8x128xf32>,
    return
  }
  func.func @transform_0(%arg0: i32, %arg1: i32) -> (i32, i32, i32, i32) {
    %c0_i32 = arith.constant 0 : i32
    %c0_i32_0 = arith.constant 0 : i32
    %c0_i32_1 = arith.constant 0 : i32
    return %arg0, %arg1, %c0_i32, %c0_i32_0 : i32, i32, i32, i32
  }
  func.func @transform_1(%arg0: i32, %arg1: i32) -> (i32, i32, i32, i32) {
    %c1_i32 = arith.constant 1 : i32
    %0 = arith.subi %arg1, %c1_i32 : i32
    %c0_i32 = arith.constant 0 : i32
    %1 = arith.maxsi %0, %c0_i32 : i32
    %c0_i32_0 = arith.constant 0 : i32
    %c0_i32_1 = arith.constant 0 : i32
    %c0_i32_2 = arith.constant 0 : i32
    return %arg0, %1, %c0_i32_0, %c0_i32_1 : i32, i32, i32, i32
  }
  func.func @transform_2(%arg0: i32, %arg1: i32) -> (i32, i32, i32, i32) {
    %c1_i32 = arith.constant 1 : i32
    %0 = arith.addi %arg1, %c1_i32 : i32
    %c1_i32_0 = arith.constant 1 : i32
    %1 = arith.minsi %0, %c1_i32_0 : i32
    %c0_i32 = arith.constant 0 : i32
    %c0_i32_1 = arith.constant 0 : i32
    %c0_i32_2 = arith.constant 0 : i32
    return %arg0, %1, %c0_i32, %c0_i32_1 : i32, i32, i32, i32
  }
  func.func @transform_3(%arg0: i32, %arg1: i32) -> (i32, i32) {
    %c0_i32 = arith.constant 0 : i32
    %c0_i32_0 = arith.constant 0 : i32
    %c0_i32_1 = arith.constant 0 : i32
    return %c0_i32, %c0_i32_0 : i32, i32
  }
  func.func @transform_4(%arg0: i32, %arg1: i32) -> (i32, i32) {
    %c0_i32 = arith.constant 0 : i32
    %c0_i32_0 = arith.constant 0 : i32
    %c0_i32_1 = arith.constant 0 : i32
    return %c0_i32, %c0_i32_0 : i32, i32
  }
  func.func @transform_5(%arg0: i32, %arg1: i32) -> (i32, i32) {
    %c0_i32 = arith.constant 0 : i32
    %c0_i32_0 = arith.constant 0 : i32
    %c0_i32_1 = arith.constant 0 : i32
    return %c0_i32, %c0_i32_0 : i32, i32
  }
  func.func @transform_6(%arg0: i32, %arg1: i32) -> (i32, i32) {
    %c0_i32 = arith.constant 0 : i32
    %c0_i32_0 = arith.constant 0 : i32
    %c0_i32_1 = arith.constant 0 : i32
    return %c0_i32, %c0_i32_0 : i32, i32
  }
  func.func @transform_7(%arg0: i32, %arg1: i32) -> (i32, i32) {
    %c0_i32 = arith.constant 0 : i32
    %c0_i32_0 = arith.constant 0 : i32
    %c0_i32_1 = arith.constant 0 : i32
    return %c0_i32, %c0_i32_0 : i32, i32
  }
  func.func @transform_8(%arg0: i32, %arg1: i32) -> (i32, i32) {
    %c0_i32 = arith.constant 0 : i32
    %c0_i32_0 = arith.constant 0 : i32
    %c0_i32_1 = arith.constant 0 : i32
    return %c0_i32, %c0_i32_0 : i32, i32
  }
  func.func @transform_9(%arg0: i32, %arg1: i32) -> (i32, i32) {
    %c0_i32 = arith.constant 0 : i32
    %c0_i32_0 = arith.constant 0 : i32
    %c0_i32_1 = arith.constant 0 : i32
    return %c0_i32, %c0_i32_0 : i32, i32
  }
  func.func @transform_10(%arg0: i32, %arg1: i32) -> (i32, i32, i32) {
    %c0_i32 = arith.constant 0 : i32
    %c0_i32_0 = arith.constant 0 : i32
    return %arg0, %c0_i32, %arg1 : i32, i32, i32
  }
}

</mosaic_0001>

<llo_original>
// kernel: tpu_custom_call.1
$region0: #{tpu_custom_call.1}
  #allocation0 [shape = 'u32[]', space=smem, size = 0x4, offset = 0x4, fixed_abs, tag = 'smem constant byte address 0x4 - core index']
  #allocation1 [shape = 'u32[144,128]{1,0:T(1,128)}', space=vmem, size = 0x12000, scoped, tag = 'internal scratch']
  %s0 = inlined_call_operand.vmem [shape: f32[2,2,12,128], index: 0, kind: input, shape index: {}]
  %s1 = inlined_call_operand.vmem [shape: f32[2,2,12,128], index: 1, kind: input, shape index: {}]
  %s2 = inlined_call_operand.vmem [shape: f32[2,2,12,128], index: 2, kind: input, shape index: {}]
  %s3 = inlined_call_operand.vmem [shape: f32[4,192], index: 3, kind: input, shape index: {}]
  %s4 = inlined_call_operand.vmem [shape: bf16[576,12], index: 4, kind: input, shape index: {}]
  %s5 = inlined_call_operand.vmem [shape: f32[64,1], index: 5, kind: input, shape index: {}]
  %s6 = inlined_call_operand.vmem [shape: bf16[144,64], index: 6, kind: input, shape index: {}]
  %s7 = inlined_call_operand.vmem [shape: f32[12,1], index: 7, kind: input, shape index: {}]
  %s8 = inlined_call_operand.vmem [shape: f32[8,12], index: 8, kind: input, shape index: {}]
  %s9 = inlined_call_operand.vmem [shape: f32[8,1], index: 9, kind: input, shape index: {}]
  %s10 = inlined_call_operand.hbm [shape: f32[2,8,256], index: 10, kind: output, shape index: {}]
  %s11 = sld [smem:[#allocation0]]
  $region73: #{tpu_custom_call.1} parent=0
    _
  %s13 = ssub.s32 1, %s11
  %s14 = scalar_select 0, %s13, %s11
  $region1: #{tpu_custom_call.1} parent=0
    #allocation2 [shape = 'u8[8192]{0}', space=vmem, size = 0x2000, scoped, tag = 'output window, operand 0']
    #allocation3 [shape = 's32[2]{0}', space=sflag, size = 0x8, scoped, tag = 'scoped memory for tpu_custom_call.1']
    %15 = vsyncpa [#allocation3], 0
    %s16 = scalar_lea.sflag [#allocation3], 1
    %17 = vsyncpa %s16, 0
    loop: start=0, step=1, limit=6
    $region2: #{tpu_custom_call.1} parent=1 // loop_pre_header
      _
    $region3: #{tpu_custom_call.1} parent=1 // loop_header
      %s19 = sphi 0, %s23
      %p20 = scmp.ge.s32.totalorder %s19, 6
      %s26 = sphi 0, %s38
      %s27 = sphi 0, %s34
      %s28 = sphi 0, %s26
      %s29 = sphi 0, %s27
      %s30 = sphi 0, %s28
      %s31 = sphi 0, %s29
      %s43 = sphi 0, %s45
      %s46 = sphi 0, %s43
      %s47 = sphi 0, %s46
      %s63 = sphi 0, %s47
      %s77 = sphi 0, %s79
      %s80 = sphi 0, %s77
      %s81 = sphi 0, %s80
      %s97 = sphi 0, %s81
      %s111 = sphi 0, %s113
      %s114 = sphi 0, %s111
      %s115 = sphi 0, %s114
      %s131 = sphi 0, %s115
      %s135 = sphi 0, %s135
      %s137 = sphi 0, %s135
      %s138 = sphi 0, %s137
      %s152 = sphi 0, %s138
      %s156 = sphi 0, %s156
      %s158 = sphi 0, %s156
      %s159 = sphi 0, %s158
      %s173 = sphi 0, %s159
      %s177 = sphi 0, %s177
      %s179 = sphi 0, %s177
      %s180 = sphi 0, %s179
      %s194 = sphi 0, %s180
      %s198 = sphi 0, %s198
      %s200 = sphi 0, %s198
      %s201 = sphi 0, %s200
      %s215 = sphi 0, %s201
      %s219 = sphi 0, %s219
      %s221 = sphi 0, %s219
      %s222 = sphi 0, %s221
      %s236 = sphi 0, %s222
      %s240 = sphi 0, %s240
      %s242 = sphi 0, %s240
      %s243 = sphi 0, %s242
      %s257 = sphi 0, %s243
      %s261 = sphi 0, %s261
      %s263 = sphi 0, %s261
      %s264 = sphi 0, %s263
      %s278 = sphi 0, %s264
      %s286 = sphi 0, %s288
      %s289 = sphi 0, %s286
      %s290 = sphi 0, %s289
      %s306 = sphi 0, %s290
    $region4: #{tpu_custom_call.1} parent=1 // loop_header_branch
      %22 = sbr.rel (%p20) target = $region8
    $region5: #{tpu_custom_call.1} parent=1 // loop_body
      %s24 = ssub.s32 %s19, 1
      %s25 = ssub.s32 %s19, 2
      %s32 = sadd.s32 1, %s27
      %p33 = scmp.ge.s32.totalorder %s32, 2
      %s34 = scalar_select %p33, 0, %s32
      %s35 = sadd.s32 1, %s26
      %s36 = scalar_select %p33, %s35, %s26
      %p37 = scmp.ge.s32.totalorder %s36, 2
      %s38 = scalar_select %p37, 0, %s36
      %s39 = ssub.s32 %s26, %s38
      %s40 = ssub.s32 %s27, %s34
      %s41 = sor.u32 %s39, %s40
      %p42 = scmp.eq.s32.totalorder %s41, 0
      %s44 = sadd.s32 %s43, 1
      %s45 = scalar_select %p42, %s43, %s44
      %p48 = pneg %p42
      %p49 = scmp.eq.s32.totalorder %s19, 3
      %p50 = por %p48, %p49
      %p51 = scmp.ne.s32.totalorder %s43, %s46
      %p52 = scmp.eq.s32.totalorder %s19, 0
      %p53 = por %p51, %p52
      %p54 = scmp.ne.s32.totalorder %s43, %s46
      %p55 = scmp.eq.s32.totalorder %s24, 3
      %p56 = por %p54, %p55
      %p57 = scmp.ne.s32.totalorder %s46, %s47
      %p58 = scmp.eq.s32.totalorder %s24, 0
      %p59 = por %p57, %p58
      %p60 = scmp.ne.s32.totalorder %s46, %s47
      %p61 = scmp.eq.s32.totalorder %s25, 3
      %p62 = por %p60, %p61
      %p64 = scmp.ne.s32.totalorder %s47, %s63
      %p65 = scmp.eq.s32.totalorder %s25, 0
      %p66 = por %p64, %p65
      %s67 = ssub.s32 %s27, 1
      %p68 = scmp.gt.s32.totalorder %s67, 0
      %s69 = scalar_select %p68, %s67, 0
      %s70 = ssub.s32 %s34, 1
      %p71 = scmp.gt.s32.totalorder %s70, 0
      %s72 = scalar_select %p71, %s70, 0
      %s73 = ssub.s32 %s26, %s38
      %s74 = ssub.s32 %s69, %s72
      %s75 = sor.u32 %s73, %s74
      %p76 = scmp.eq.s32.totalorder %s75, 0
      %s78 = sadd.s32 %s77, 1
      %s79 = scalar_select %p76, %s77, %s78
      %p82 = pneg %p76
      %p83 = scmp.eq.s32.totalorder %s19, 3
      %p84 = por %p82, %p83
      %p85 = scmp.ne.s32.totalorder %s77, %s80
      %p86 = scmp.eq.s32.totalorder %s19, 0
      %p87 = por %p85, %p86
      %p88 = scmp.ne.s32.totalorder %s77, %s80
      %p89 = scmp.eq.s32.totalorder %s24, 3
      %p90 = por %p88, %p89
      %p91 = scmp.ne.s32.totalorder %s80, %s81
      %p92 = scmp.eq.s32.totalorder %s24, 0
      %p93 = por %p91, %p92
      %p94 = scmp.ne.s32.totalorder %s80, %s81
      %p95 = scmp.eq.s32.totalorder %s25, 3
      %p96 = por %p94, %p95
      %p98 = scmp.ne.s32.totalorder %s81, %s97
      %p99 = scmp.eq.s32.totalorder %s25, 0
      %p100 = por %p98, %p99
      %s101 = sadd.s32 %s27, 1
      %p102 = scmp.lt.s32.totalorder %s101, 1
      %s103 = scalar_select %p102, %s101, 1
      %s104 = sadd.s32 %s34, 1
      %p105 = scmp.lt.s32.totalorder %s104, 1
      %s106 = scalar_select %p105, %s104, 1
      %s107 = ssub.s32 %s26, %s38
      %s108 = ssub.s32 %s103, %s106
      %s109 = sor.u32 %s107, %s108
      %p110 = scmp.eq.s32.totalorder %s109, 0
      %s112 = sadd.s32 %s111, 1
      %s113 = scalar_select %p110, %s111, %s112
      %p116 = pneg %p110
      %p117 = scmp.eq.s32.totalorder %s19, 3
      %p118 = por %p116, %p117
      %p119 = scmp.ne.s32.totalorder %s111, %s114
      %p120 = scmp.eq.s32.totalorder %s19, 0
      %p121 = por %p119, %p120
      %p122 = scmp.ne.s32.totalorder %s111, %s114
      %p123 = scmp.eq.s32.totalorder %s24, 3
      %p124 = por %p122, %p123
      %p125 = scmp.ne.s32.totalorder %s114, %s115
      %p126 = scmp.eq.s32.totalorder %s24, 0
      %p127 = por %p125, %p126
      %p128 = scmp.ne.s32.totalorder %s114, %s115
      %p129 = scmp.eq.s32.totalorder %s25, 3
      %p130 = por %p128, %p129
      %p132 = scmp.ne.s32.totalorder %s115, %s131
      %p133 = scmp.eq.s32.totalorder %s25, 0
      %p134 = por %p132, %p133
      %s136 = sadd.s32 %s135, 1
      %p139 = scmp.eq.s32.totalorder %s19, 3
      %p140 = scmp.ne.s32.totalorder %s135, %s137
      %p141 = scmp.eq.s32.totalorder %s19, 0
      %p142 = por %p140, %p141
      %p143 = scmp.ne.s32.totalorder %s135, %s137
      %p144 = scmp.eq.s32.totalorder %s24, 3
      %p145 = por %p143, %p144
      %p146 = scmp.ne.s32.totalorder %s137, %s138
      %p147 = scmp.eq.s32.totalorder %s24, 0
      %p148 = por %p146, %p147
      %p149 = scmp.ne.s32.totalorder %s137, %s138
      %p150 = scmp.eq.s32.totalorder %s25, 3
      %p151 = por %p149, %p150
      %p153 = scmp.ne.s32.totalorder %s138, %s152
      %p154 = scmp.eq.s32.totalorder %s25, 0
      %p155 = por %p153, %p154
      %s157 = sadd.s32 %s156, 1
      %p160 = scmp.eq.s32.totalorder %s19, 3
      %p161 = scmp.ne.s32.totalorder %s156, %s158
      %p162 = scmp.eq.s32.totalorder %s19, 0
      %p163 = por %p161, %p162
      %p164 = scmp.ne.s32.totalorder %s156, %s158
      %p165 = scmp.eq.s32.totalorder %s24, 3
      %p166 = por %p164, %p165
      %p167 = scmp.ne.s32.totalorder %s158, %s159
      %p168 = scmp.eq.s32.totalorder %s24, 0
      %p169 = por %p167, %p168
      %p170 = scmp.ne.s32.totalorder %s158, %s159
      %p171 = scmp.eq.s32.totalorder %s25, 3
      %p172 = por %p170, %p171
      %p174 = scmp.ne.s32.totalorder %s159, %s173
      %p175 = scmp.eq.s32.totalorder %s25, 0
      %p176 = por %p174, %p175
      %s178 = sadd.s32 %s177, 1
      %p181 = scmp.eq.s32.totalorder %s19, 3
      %p182 = scmp.ne.s32.totalorder %s177, %s179
      %p183 = scmp.eq.s32.totalorder %s19, 0
      %p184 = por %p182, %p183
      %p185 = scmp.ne.s32.totalorder %s177, %s179
      %p186 = scmp.eq.s32.totalorder %s24, 3
      %p187 = por %p185, %p186
      %p188 = scmp.ne.s32.totalorder %s179, %s180
      %p189 = scmp.eq.s32.totalorder %s24, 0
      %p190 = por %p188, %p189
      %p191 = scmp.ne.s32.totalorder %s179, %s180
      %p192 = scmp.eq.s32.totalorder %s25, 3
      %p193 = por %p191, %p192
      %p195 = scmp.ne.s32.totalorder %s180, %s194
      %p196 = scmp.eq.s32.totalorder %s25, 0
      %p197 = por %p195, %p196
      %s199 = sadd.s32 %s198, 1
      %p202 = scmp.eq.s32.totalorder %s19, 3
      %p203 = scmp.ne.s32.totalorder %s198, %s200
      %p204 = scmp.eq.s32.totalorder %s19, 0
      %p205 = por %p203, %p204
      %p206 = scmp.ne.s32.totalorder %s198, %s200
      %p207 = scmp.eq.s32.totalorder %s24, 3
      %p208 = por %p206, %p207
      %p209 = scmp.ne.s32.totalorder %s200, %s201
      %p210 = scmp.eq.s32.totalorder %s24, 0
      %p211 = por %p209, %p210
      %p212 = scmp.ne.s32.totalorder %s200, %s201
      %p213 = scmp.eq.s32.totalorder %s25, 3
      %p214 = por %p212, %p213
      %p216 = scmp.ne.s32.totalorder %s201, %s215
      %p217 = scmp.eq.s32.totalorder %s25, 0
      %p218 = por %p216, %p217
      %s220 = sadd.s32 %s219, 1
      %p223 = scmp.eq.s32.totalorder %s19, 3
      %p224 = scmp.ne.s32.totalorder %s219, %s221
      %p225 = scmp.eq.s32.totalorder %s19, 0
      %p226 = por %p224, %p225
      %p227 = scmp.ne.s32.totalorder %s219, %s221
      %p228 = scmp.eq.s32.totalorder %s24, 3
      %p229 = por %p227, %p228
      %p230 = scmp.ne.s32.totalorder %s221, %s222
      %p231 = scmp.eq.s32.totalorder %s24, 0
      %p232 = por %p230, %p231
      %p233 = scmp.ne.s32.totalorder %s221, %s222
      %p234 = scmp.eq.s32.totalorder %s25, 3
      %p235 = por %p233, %p234
      %p237 = scmp.ne.s32.totalorder %s222, %s236
      %p238 = scmp.eq.s32.totalorder %s25, 0
      %p239 = por %p237, %p238
      %s241 = sadd.s32 %s240, 1
      %p244 = scmp.eq.s32.totalorder %s19, 3
      %p245 = scmp.ne.s32.totalorder %s240, %s242
      %p246 = scmp.eq.s32.totalorder %s19, 0
      %p247 = por %p245, %p246
      %p248 = scmp.ne.s32.totalorder %s240, %s242
      %p249 = scmp.eq.s32.totalorder %s24, 3
      %p250 = por %p248, %p249
      %p251 = scmp.ne.s32.totalorder %s242, %s243
      %p252 = scmp.eq.s32.totalorder %s24, 0
      %p253 = por %p251, %p252
      %p254 = scmp.ne.s32.totalorder %s242, %s243
      %p255 = scmp.eq.s32.totalorder %s25, 3
      %p256 = por %p254, %p255
      %p258 = scmp.ne.s32.totalorder %s243, %s257
      %p259 = scmp.eq.s32.totalorder %s25, 0
      %p260 = por %p258, %p259
      %s262 = sadd.s32 %s261, 1
      %p265 = scmp.eq.s32.totalorder %s19, 3
      %p266 = scmp.ne.s32.totalorder %s261, %s263
      %p267 = scmp.eq.s32.totalorder %s19, 0
      %p268 = por %p266, %p267
      %p269 = scmp.ne.s32.totalorder %s261, %s263
      %p270 = scmp.eq.s32.totalorder %s24, 3
      %p271 = por %p269, %p270
      %p272 = scmp.ne.s32.totalorder %s263, %s264
      %p273 = scmp.eq.s32.totalorder %s24, 0
      %p274 = por %p272, %p273
      %p275 = scmp.ne.s32.totalorder %s263, %s264
      %p276 = scmp.eq.s32.totalorder %s25, 3
      %p277 = por %p275, %p276
      %p279 = scmp.ne.s32.totalorder %s264, %s278
      %p280 = scmp.eq.s32.totalorder %s25, 0
      %p281 = por %p279, %p280
      %s282 = ssub.s32 %s26, %s38
      %s283 = ssub.s32 %s27, %s34
      %s284 = sor.u32 %s282, %s283
      %p285 = scmp.eq.s32.totalorder %s284, 0
      %s287 = sadd.s32 %s286, 1
      %s288 = scalar_select %p285, %s286, %s287
      %p291 = pneg %p285
      %p292 = scmp.eq.s32.totalorder %s19, 3
      %p293 = por %p291, %p292
      %p294 = scmp.ne.s32.totalorder %s286, %s289
      %p295 = scmp.eq.s32.totalorder %s19, 0
      %p296 = por %p294, %p295
      %p297 = scmp.ne.s32.totalorder %s286, %s289
      %p298 = scmp.eq.s32.totalorder %s24, 3
      %p299 = por %p297, %p298
      %p300 = scmp.ne.s32.totalorder %s289, %s290
      %p301 = scmp.eq.s32.totalorder %s24, 0
      %p302 = por %p300, %p301
      %p303 = scmp.ne.s32.totalorder %s289, %s290
      %p304 = scmp.eq.s32.totalorder %s25, 3
      %p305 = por %p303, %p304
      %p307 = scmp.ne.s32.totalorder %s290, %s306
      %p308 = scmp.eq.s32.totalorder %s25, 0
      %p309 = por %p307, %p308
      %p310 = scmp.le.s32.totalorder 1, %s19
      %p311 = scmp.lt.s32.totalorder %s19, 5
      %p312 = pnand %p310, %p311
      %p313 = pneg %p312
      // Predicated region
      $region9: #{tpu_custom_call.1} parent=5 // pred_check
        _
      $region10: #{tpu_custom_call.1} parent=5 // pred_check_branch
        %315 = sbr.rel (%p312) target = $region12
      $region11: #{tpu_custom_call.1} parent=5 // pred_region
        %s316 = ssub.s32 %s19, 1
        // Predicated region
        $region13: #{tpu_custom_call.1} parent=11 // pred_check
          %p317 = pneg %p148
        $region14: #{tpu_custom_call.1} parent=11 // pred_check_branch
          %319 = sbr.rel (%p317) target = $region16
        $region15: #{tpu_custom_call.1} parent=11 // pred_region
          _
        $region16: #{tpu_custom_call.1} parent=11 // pred_fallthru
          _
        // Predicated region
        $region17: #{tpu_custom_call.1} parent=11 // pred_check
          %p320 = pneg %p169
        $region18: #{tpu_custom_call.1} parent=11 // pred_check_branch
          %322 = sbr.rel (%p320) target = $region20
        $region19: #{tpu_custom_call.1} parent=11 // pred_region
          _
        $region20: #{tpu_custom_call.1} parent=11 // pred_fallthru
          _
        // Predicated region
        $region21: #{tpu_custom_call.1} parent=11 // pred_check
          %p323 = pneg %p190
        $region22: #{tpu_custom_call.1} parent=11 // pred_check_branch
          %325 = sbr.rel (%p323) target = $region24
        $region23: #{tpu_custom_call.1} parent=11 // pred_region
          _
        $region24: #{tpu_custom_call.1} parent=11 // pred_fallthru
          _
        // Predicated region
        $region25: #{tpu_custom_call.1} parent=11 // pred_check
          %p326 = pneg %p211
        $region26: #{tpu_custom_call.1} parent=11 // pred_check_branch
          %328 = sbr.rel (%p326) target = $region28
        $region27: #{tpu_custom_call.1} parent=11 // pred_region
          _
        $region28: #{tpu_custom_call.1} parent=11 // pred_fallthru
          _
        // Predicated region
        $region29: #{tpu_custom_call.1} parent=11 // pred_check
          %p329 = pneg %p232
        $region30: #{tpu_custom_call.1} parent=11 // pred_check_branch
          %331 = sbr.rel (%p329) target = $region32
        $region31: #{tpu_custom_call.1} parent=11 // pred_region
          _
        $region32: #{tpu_custom_call.1} parent=11 // pred_fallthru
          _
        // Predicated region
        $region33: #{tpu_custom_call.1} parent=11 // pred_check
          %p332 = pneg %p253
        $region34: #{tpu_custom_call.1} parent=11 // pred_check_branch
          %334 = sbr.rel (%p332) target = $region36
        $region35: #{tpu_custom_call.1} parent=11 // pred_region
          _
        $region36: #{tpu_custom_call.1} parent=11 // pred_fallthru
          _
        // Predicated region
        $region37: #{tpu_custom_call.1} parent=11 // pred_check
          %p335 = pneg %p274
        $region38: #{tpu_custom_call.1} parent=11 // pred_check_branch
          %337 = sbr.rel (%p335) target = $region40
        $region39: #{tpu_custom_call.1} parent=11 // pred_region
          _
        $region40: #{tpu_custom_call.1} parent=11 // pred_fallthru
          _
      $region12: #{tpu_custom_call.1} parent=5 // pred_fallthru
        _
      %p338 = scmp.lt.s32.totalorder %s19, 4
      // Predicated region
      $region41: #{tpu_custom_call.1} parent=5 // pred_check
        %p339 = pneg %p338
      $region42: #{tpu_custom_call.1} parent=5 // pred_check_branch
        %341 = sbr.rel (%p339) target = $region44
      $region43: #{tpu_custom_call.1} parent=5 // pred_region
        // Predicated region
        $region45: #{tpu_custom_call.1} parent=43 // pred_check
          %p342 = pneg %p53
        $region46: #{tpu_custom_call.1} parent=43 // pred_check_branch
          %344 = sbr.rel (%p342) target = $region48
        $region47: #{tpu_custom_call.1} parent=43 // pred_region
          %p345 = scmp.lt.s32.totalorder %s26, 1
          %s346 = scalar_select %p345, %s26, 1
          %p347 = scmp.lt.s32.totalorder %s27, 1
          %s348 = scalar_select %p347, %s27, 1
          %s349 = smul.addr %s348, 2
          %s350 = smul.addr %s346, 4
          %s351 = sadd.s32 %s349, %s350
          %s352 = smul.addr %s351, 8
          %s353 = scalar_lea.vmem %s0, %s352
        $region48: #{tpu_custom_call.1} parent=43 // pred_fallthru
          _
        // Predicated region
        $region49: #{tpu_custom_call.1} parent=43 // pred_check
          %p354 = pneg %p87
        $region50: #{tpu_custom_call.1} parent=43 // pred_check_branch
          %356 = sbr.rel (%p354) target = $region52
        $region51: #{tpu_custom_call.1} parent=43 // pred_region
          %s357 = ssub.s32 %s27, 1
          %p358 = scmp.gt.s32.totalorder %s357, 0
          %s359 = scalar_select %p358, %s357, 0
          %p360 = scmp.lt.s32.totalorder %s26, 1
          %s361 = scalar_select %p360, %s26, 1
          %p362 = scmp.lt.s32.totalorder %s359, 1
          %s363 = scalar_select %p362, %s359, 1
          %s364 = smul.addr %s363, 2
          %s365 = smul.addr %s361, 4
          %s366 = sadd.s32 %s364, %s365
          %s367 = smul.addr %s366, 8
          %s368 = scalar_lea.vmem %s1, %s367
          %s369 = ssub.s32 %s27, 1
          %p370 = scmp.gt.s32.totalorder %s369, 0
          %s371 = scalar_select %p370, %s369, 0
        $region52: #{tpu_custom_call.1} parent=43 // pred_fallthru
          _
        // Predicated region
        $region53: #{tpu_custom_call.1} parent=43 // pred_check
          %p372 = pneg %p121
        $region54: #{tpu_custom_call.1} parent=43 // pred_check_branch
          %374 = sbr.rel (%p372) target = $region56
        $region55: #{tpu_custom_call.1} parent=43 // pred_region
          %s375 = sadd.s32 %s27, 1
          %p376 = scmp.lt.s32.totalorder %s375, 1
          %s377 = scalar_select %p376, %s375, 1
          %p378 = scmp.lt.s32.totalorder %s26, 1
          %s379 = scalar_select %p378, %s26, 1
          %p380 = scmp.lt.s32.totalorder %s377, 1
          %s381 = scalar_select %p380, %s377, 1
          %s382 = smul.addr %s381, 2
          %s383 = smul.addr %s379, 4
          %s384 = sadd.s32 %s382, %s383
          %s385 = smul.addr %s384, 8
          %s386 = scalar_lea.vmem %s2, %s385
          %s387 = sadd.s32 %s27, 1
          %p388 = scmp.lt.s32.totalorder %s387, 1
          %s389 = scalar_select %p388, %s387, 1
        $region56: #{tpu_custom_call.1} parent=43 // pred_fallthru
          _
      $region44: #{tpu_custom_call.1} parent=5 // pred_fallthru
        _
      %p390 = scmp.le.s32.totalorder 1, %s19
      %p391 = scmp.lt.s32.totalorder %s19, 5
      %p392 = pnand %p390, %p391
      %p393 = pneg %p392
      // Predicated region
      $region57: #{tpu_custom_call.1} parent=5 // pred_check
        _
      $region58: #{tpu_custom_call.1} parent=5 // pred_check_branch
        %395 = sbr.rel (%p392) target = $region60
      $region59: #{tpu_custom_call.1} parent=5 // pred_region
        %s396 = ssub.s32 %s19, 1
        %p397 = scmp.lt.s32.totalorder %s28, 1
        %s398 = scalar_select %p397, %s28, 1
        %p399 = scmp.lt.s32.totalorder %s29, 1
        %s400 = scalar_select %p399, %s29, 1
        %s401 = smul.addr %s400, 2
        %s402 = smul.addr %s398, 4
        %s403 = sadd.s32 %s401, %s402
        %s404 = smul.addr %s403, 8
        %s405 = scalar_lea.vmem %s0, %s404
        %p406 = pneg %p59
        %p407 = pneg %p56
        %s408 = ssub.s32 %s29, 1
        %p409 = scmp.gt.s32.totalorder %s408, 0
        %s410 = scalar_select %p409, %s408, 0
        %p411 = scmp.lt.s32.totalorder %s28, 1
        %s412 = scalar_select %p411, %s28, 1
        %p413 = scmp.lt.s32.totalorder %s410, 1
        %s414 = scalar_select %p413, %s410, 1
        %s415 = smul.addr %s414, 2
        %s416 = smul.addr %s412, 4
        %s417 = sadd.s32 %s415, %s416
        %s418 = smul.addr %s417, 8
        %s419 = scalar_lea.vmem %s1, %s418
        %p420 = pneg %p93
        %p421 = pneg %p90
        %s422 = sadd.s32 %s29, 1
        %p423 = scmp.lt.s32.totalorder %s422, 1
        %s424 = scalar_select %p423, %s422, 1
        %p425 = scmp.lt.s32.totalorder %s28, 1
        %s426 = scalar_select %p425, %s28, 1
        %p427 = scmp.lt.s32.totalorder %s424, 1
        %s428 = scalar_select %p427, %s424, 1
        %s429 = smul.addr %s428, 2
        %s430 = smul.addr %s426, 4
        %s431 = sadd.s32 %s429, %s430
        %s432 = smul.addr %s431, 8
        %s433 = scalar_lea.vmem %s2, %s432
        %p434 = pneg %p127
        %p435 = pneg %p124
        %p436 = pneg %p148
        %p437 = pneg %p145
        %p438 = pneg %p169
        %p439 = pneg %p166
        %p440 = pneg %p190
        %p441 = pneg %p187
        %p442 = pneg %p211
        %p443 = pneg %p208
        %p444 = pneg %p232
        %p445 = pneg %p229
        %p446 = pneg %p253
        %p447 = pneg %p250
        %p448 = pneg %p274
        %p449 = pneg %p271
        %p450 = pneg %p302
        %p451 = pneg %p299
        %s452 = sand.u32 %s289, 1
        %s453 = scalar_lea.sflag [#allocation3], %s452
        %s454 = sand.u32 %s289, 1
        %s455 = smul.addr %s454, 8
        %s456 = scalar_lea.vmem [#allocation2], %s455
        %p457 = scmp.lt.s32.totalorder %s28, 1
        %s458 = scalar_select %p457, %s28, 1
        %p459 = scmp.lt.s32.totalorder %s29, 1
        %s460 = scalar_select %p459, %s29, 1
        %s461 = smul.addr %s460, 2
        %s462 = smul.addr %s458, 4
        %s463 = sadd.s32 %s461, %s462
        %s464 = smul.addr %s463, 8
        %s465 = scalar_lea.vmem %s0, %s464
        %s466 = ssub.s32 %s29, 1
        %p467 = scmp.gt.s32.totalorder %s466, 0
        %s468 = scalar_select %p467, %s466, 0
        %p469 = scmp.lt.s32.totalorder %s28, 1
        %s470 = scalar_select %p469, %s28, 1
        %p471 = scmp.lt.s32.totalorder %s468, 1
        %s472 = scalar_select %p471, %s468, 1
        %s473 = smul.addr %s472, 2
        %s474 = smul.addr %s470, 4
        %s475 = sadd.s32 %s473, %s474
        %s476 = smul.addr %s475, 8
        %s477 = scalar_lea.vmem %s1, %s476
        %s478 = ssub.s32 %s29, 1
        %p479 = scmp.gt.s32.totalorder %s478, 0
        %s480 = scalar_select %p479, %s478, 0
        %s481 = sadd.s32 %s29, 1
        %p482 = scmp.lt.s32.totalorder %s481, 1
        %s483 = scalar_select %p482, %s481, 1
        %p484 = scmp.lt.s32.totalorder %s28, 1
        %s485 = scalar_select %p484, %s28, 1
        %p486 = scmp.lt.s32.totalorder %s483, 1
        %s487 = scalar_select %p486, %s483, 1
        %s488 = smul.addr %s487, 2
        %s489 = smul.addr %s485, 4
        %s490 = sadd.s32 %s488, %s489
        %s491 = smul.addr %s490, 8
        %s492 = scalar_lea.vmem %s2, %s491
        %s493 = sadd.s32 %s29, 1
        %p494 = scmp.lt.s32.totalorder %s493, 1
        %s495 = scalar_select %p494, %s493, 1
        %v497 = vld [vmem:[%s465] sm:$0xff]
        %v498 = vld [vmem:[%s465 + $0x8] sm:$0xf]
        %v499 = vld [vmem:[%s477] sm:$0xff]
        %v500 = vld [vmem:[%s477 + $0x8] sm:$0xf]
        %v501 = vld [vmem:[%s492] sm:$0xff]
        %v502 = vld [vmem:[%s492 + $0x8] sm:$0xf]
        %p503 = scmp.eq.s32.totalorder %s29, 0
        %s504 = scalar_select %p503, 1.0, 0.0
        %p505 = scmp.eq.s32.totalorder %s29, 1
        %s506 = scalar_select %p505, 1.0, 0.0
        %s507 = ssub.f32 1.0, %s504
        %v508 = vstv %s507
        %v509 = vmul.f32 %v499, %v508
        %v510 = vmul.f32 %v500, %v508
        %s511 = ssub.f32 1.0, %s506
        %v512 = vstv %s511
        %v513 = vmul.f32 %v501, %v512
        %v514 = vmul.f32 %v502, %v512
        %517 = vrot.lane.b32.xlu0 %v509, 64
        %v518 = vpop.permute.xlu0 %517
        %519 = vrot.lane.b32.xlu0 %v510, 64
        %v520 = vpop.permute.xlu0 %519
        %525 = vrot.lane.b32.xlu0 %v497, 64
        %v526 = vpop.permute.xlu0 %525
        %527 = vrot.lane.b32.xlu0 %v498, 64
        %v528 = vpop.permute.xlu0 %527
        %533 = vrot.lane.b32.xlu0 %v513, 64
        %v534 = vpop.permute.xlu0 %533
        %535 = vrot.lane.b32.xlu0 %v514, 64
        %v536 = vpop.permute.xlu0 %535
        %vm539 = vcmask 261120
        %v540 = vsel %vm539, 0.0, %v518
        %v541 = vsel %vm539, 0.0, %v520
        %vm542 = vcmask 523264
        %v543 = vsel %vm542, %v540, %v526
        %v544 = vsel %vm542, %v541, %v528
        %v545 = vsel %vm542, %v526, %v534
        %v546 = vsel %vm542, %v528, %v536
        %vm547 = vcmask 785408
        %v548 = vsel %vm547, %v545, 0.0
        %v549 = vsel %vm547, %v546, 0.0
        %v550 = vld [vmem:[%s3] sm:$0xff]
        %v551 = vld [vmem:[%s4] sm:$0xf]
        %v552 = vld [vmem:[%s4 + $0x4] sm:$0xf]
        %v553 = vld [vmem:[%s4 + $0x8] sm:$0xf]
        %v554 = vld [vmem:[%s4 + $0xc] sm:$0xf]
        %v555 = vld [vmem:[%s4 + $0x10] sm:$0xf]
        %v556 = vld [vmem:[%s4 + $0x14] sm:$0xf]
        %v557 = vld [vmem:[%s4 + $0x18] sm:$0xf]
        %v558 = vld [vmem:[%s4 + $0x1c] sm:$0xf]
        %v559 = vld [vmem:[%s4 + $0x20] sm:$0xf]
        %v560 = vld [vmem:[%s4 + $0x24] sm:$0xf]
        %v561 = vld [vmem:[%s4 + $0x28] sm:$0xf]
        %v562 = vld [vmem:[%s4 + $0x2c] sm:$0xf]
        %v563 = vld [vmem:[%s4 + $0x30] sm:$0xf]
        %v564 = vld [vmem:[%s4 + $0x34] sm:$0xf]
        %v565 = vld [vmem:[%s4 + $0x38] sm:$0xf]
        %v566 = vld [vmem:[%s4 + $0x3c] sm:$0xf]
        %v567 = vld [vmem:[%s4 + $0x40] sm:$0xf]
        %v568 = vld [vmem:[%s4 + $0x44] sm:$0xf]
        %v569 = vld [vmem:[%s4 + $0x48] sm:$0xf]
        %v570 = vld [vmem:[%s4 + $0x4c] sm:$0xf]
        %v571 = vld [vmem:[%s4 + $0x50] sm:$0xf]
        %v572 = vld [vmem:[%s4 + $0x54] sm:$0xf]
        %v573 = vld [vmem:[%s4 + $0x58] sm:$0xf]
        %v574 = vld [vmem:[%s4 + $0x5c] sm:$0xf]
        %v575 = vld [vmem:[%s4 + $0x60] sm:$0xf]
        %v576 = vld [vmem:[%s4 + $0x64] sm:$0xf]
        %v577 = vld [vmem:[%s4 + $0x68] sm:$0xf]
        %v578 = vld [vmem:[%s4 + $0x6c] sm:$0xf]
        %v579 = vld [vmem:[%s4 + $0x70] sm:$0xf]
        %v580 = vld [vmem:[%s4 + $0x74] sm:$0xf]
        %v581 = vld [vmem:[%s4 + $0x78] sm:$0xf]
        %v582 = vld [vmem:[%s4 + $0x7c] sm:$0xf]
        %v583 = vld [vmem:[%s4 + $0x80] sm:$0xf]
        %v584 = vld [vmem:[%s4 + $0x84] sm:$0xf]
        %v585 = vld [vmem:[%s4 + $0x88] sm:$0xf]
        %v586 = vld [vmem:[%s4 + $0x8c] sm:$0xf]
        %v587 = vld [vmem:[%s4 + $0x90] sm:$0xf]
        %v588 = vld [vmem:[%s4 + $0x94] sm:$0xf]
        %v589 = vld [vmem:[%s4 + $0x98] sm:$0xf]
        %v590 = vld [vmem:[%s4 + $0x9c] sm:$0xf]
        %v591 = vld [vmem:[%s4 + $0xa0] sm:$0xf]
        %v592 = vld [vmem:[%s4 + $0xa4] sm:$0xf]
        %v593 = vld [vmem:[%s4 + $0xa8] sm:$0xf]
        %v594 = vld [vmem:[%s4 + $0xac] sm:$0xf]
        %v595 = vld [vmem:[%s4 + $0xb0] sm:$0xf]
        %v596 = vld [vmem:[%s4 + $0xb4] sm:$0xf]
        %v597 = vld [vmem:[%s4 + $0xb8] sm:$0xf]
        %v598 = vld [vmem:[%s4 + $0xbc] sm:$0xf]
        %v599 = vld [vmem:[%s4 + $0xc0] sm:$0xf]
        %v600 = vld [vmem:[%s4 + $0xc4] sm:$0xf]
        %v601 = vld [vmem:[%s4 + $0xc8] sm:$0xf]
        %v602 = vld [vmem:[%s4 + $0xcc] sm:$0xf]
        %v603 = vld [vmem:[%s4 + $0xd0] sm:$0xf]
        %v604 = vld [vmem:[%s4 + $0xd4] sm:$0xf]
        %v605 = vld [vmem:[%s4 + $0xd8] sm:$0xf]
        %v606 = vld [vmem:[%s4 + $0xdc] sm:$0xf]
        %v607 = vld [vmem:[%s4 + $0xe0] sm:$0xf]
        %v608 = vld [vmem:[%s4 + $0xe4] sm:$0xf]
        %v609 = vld [vmem:[%s4 + $0xe8] sm:$0xf]
        %v610 = vld [vmem:[%s4 + $0xec] sm:$0xf]
        %v611 = vld [vmem:[%s4 + $0xf0] sm:$0xf]
        %v612 = vld [vmem:[%s4 + $0xf4] sm:$0xf]
        %v613 = vld [vmem:[%s4 + $0xf8] sm:$0xf]
        %v614 = vld [vmem:[%s4 + $0xfc] sm:$0xf]
        %v615 = vld [vmem:[%s4 + $0x100] sm:$0xf]
        %v616 = vld [vmem:[%s4 + $0x104] sm:$0xf]
        %v617 = vld [vmem:[%s4 + $0x108] sm:$0xf]
        %v618 = vld [vmem:[%s4 + $0x10c] sm:$0xf]
        %v619 = vld [vmem:[%s4 + $0x110] sm:$0xf]
        %v620 = vld [vmem:[%s4 + $0x114] sm:$0xf]
        %v621 = vld [vmem:[%s4 + $0x118] sm:$0xf]
        %v622 = vld [vmem:[%s4 + $0x11c] sm:$0xf]
        %v623 = vpack.c.bf16 %v544, %v543
        %v624 = vpack.c.bf16 %v549, %v548
        %v697 = vunpack.c.l.b16 %v551
        %v698 = vunpack.c.l.b16 %v552
        %v699 = vunpack.c.l.b16 %v553
        %v700 = vunpack.c.l.b16 %v554
        %v701 = vunpack.c.l.b16 %v555
        %v702 = vunpack.c.l.b16 %v556
        %v703 = vunpack.c.l.b16 %v557
        %v704 = vunpack.c.l.b16 %v558
        %v705 = vunpack.c.l.b16 %v559
        %v706 = vunpack.c.l.b16 %v560
        %v707 = vunpack.c.l.b16 %v561
        %v708 = vunpack.c.l.b16 %v562
        %v709 = vunpack.c.l.b16 %v563
        %v710 = vunpack.c.l.b16 %v564
        %v711 = vunpack.c.l.b16 %v565
        %v712 = vunpack.c.l.b16 %v566
        %v713 = vunpack.c.l.b16 %v567
        %v714 = vunpack.c.l.b16 %v568
        %v715 = vunpack.c.l.b16 %v569
        %v716 = vunpack.c.l.b16 %v570
        %v717 = vunpack.c.l.b16 %v571
        %v718 = vunpack.c.l.b16 %v572
        %v719 = vunpack.c.l.b16 %v573
        %v720 = vunpack.c.l.b16 %v574
        %v721 = vunpack.c.l.b16 %v575
        %v722 = vunpack.c.l.b16 %v576
        %v723 = vunpack.c.l.b16 %v577
        %v724 = vunpack.c.l.b16 %v578
        %v725 = vunpack.c.l.b16 %v579
        %v726 = vunpack.c.l.b16 %v580
        %v727 = vunpack.c.l.b16 %v581
        %v728 = vunpack.c.l.b16 %v582
        %v729 = vunpack.c.l.b16 %v583
        %v730 = vunpack.c.l.b16 %v584
        %v731 = vunpack.c.l.b16 %v585
        %v732 = vunpack.c.l.b16 %v586
        %v733 = vunpack.c.l.b16 %v587
        %v734 = vunpack.c.l.b16 %v588
        %v735 = vunpack.c.l.b16 %v589
        %v736 = vunpack.c.l.b16 %v590
        %v737 = vunpack.c.l.b16 %v591
        %v738 = vunpack.c.l.b16 %v592
        %v739 = vunpack.c.l.b16 %v593
        %v740 = vunpack.c.l.b16 %v594
        %v741 = vunpack.c.l.b16 %v595
        %v742 = vunpack.c.l.b16 %v596
        %v743 = vunpack.c.l.b16 %v597
        %v744 = vunpack.c.l.b16 %v598
        %v745 = vunpack.c.l.b16 %v599
        %v746 = vunpack.c.l.b16 %v600
        %v747 = vunpack.c.l.b16 %v601
        %v748 = vunpack.c.l.b16 %v602
        %v749 = vunpack.c.l.b16 %v603
        %v750 = vunpack.c.l.b16 %v604
        %v751 = vunpack.c.l.b16 %v605
        %v752 = vunpack.c.l.b16 %v606
        %v753 = vunpack.c.l.b16 %v607
        %v754 = vunpack.c.l.b16 %v608
        %v755 = vunpack.c.l.b16 %v609
        %v756 = vunpack.c.l.b16 %v610
        %v757 = vunpack.c.l.b16 %v611
        %v758 = vunpack.c.l.b16 %v612
        %v759 = vunpack.c.l.b16 %v613
        %v760 = vunpack.c.l.b16 %v614
        %v761 = vunpack.c.l.b16 %v615
        %v762 = vunpack.c.l.b16 %v616
        %v763 = vunpack.c.l.b16 %v617
        %v764 = vunpack.c.l.b16 %v618
        %v765 = vunpack.c.l.b16 %v619
        %v766 = vunpack.c.l.b16 %v620
        %v767 = vunpack.c.l.b16 %v621
        %v768 = vunpack.c.l.b16 %v622
        %v769 = vpack.c.b16 %v698, %v697
        %v770 = vpack.c.b16 %v700, %v699
        %v771 = vpack.c.b16 %v702, %v701
        %v772 = vpack.c.b16 %v704, %v703
        %v773 = vpack.c.b16 %v706, %v705
        %v774 = vpack.c.b16 %v708, %v707
        %v775 = vpack.c.b16 %v710, %v709
        %v776 = vpack.c.b16 %v712, %v711
        %v777 = vpack.c.b16 %v714, %v713
        %v778 = vpack.c.b16 %v716, %v715
        %v779 = vpack.c.b16 %v718, %v717
        %v780 = vpack.c.b16 %v720, %v719
        %v781 = vpack.c.b16 %v722, %v721
        %v782 = vpack.c.b16 %v724, %v723
        %v783 = vpack.c.b16 %v726, %v725
        %v784 = vpack.c.b16 %v728, %v727
        %v785 = vpack.c.b16 %v730, %v729
        %v786 = vpack.c.b16 %v732, %v731
        %v787 = vpack.c.b16 %v734, %v733
        %v788 = vpack.c.b16 %v736, %v735
        %v789 = vpack.c.b16 %v738, %v737
        %v790 = vpack.c.b16 %v740, %v739
        %v791 = vpack.c.b16 %v742, %v741
        %v792 = vpack.c.b16 %v744, %v743
        %v793 = vpack.c.b16 %v746, %v745
        %v794 = vpack.c.b16 %v748, %v747
        %v795 = vpack.c.b16 %v750, %v749
        %v796 = vpack.c.b16 %v752, %v751
        %v797 = vpack.c.b16 %v754, %v753
        %v798 = vpack.c.b16 %v756, %v755
        %v799 = vpack.c.b16 %v758, %v757
        %v800 = vpack.c.b16 %v760, %v759
        %v801 = vpack.c.b16 %v762, %v761
        %v802 = vpack.c.b16 %v764, %v763
        %v803 = vpack.c.b16 %v766, %v765
        %v804 = vpack.c.b16 %v768, %v767
        %vm805 = vcmask 97280
        %v807 = vsel %vm805, %v769, 0
        %v810 = vsel %vm805, %v770, 0
        %v813 = vsel %vm805, %v771, 0
        %v816 = vsel %vm805, %v772, 0
        %v819 = vsel %vm805, %v773, 0
        %v822 = vsel %vm805, %v774, 0
        %v825 = vsel %vm805, %v775, 0
        %v828 = vsel %vm805, %v776, 0
        %v831 = vsel %vm805, %v777, 0
        %v834 = vsel %vm805, %v778, 0
        %v837 = vsel %vm805, %v779, 0
        %v840 = vsel %vm805, %v780, 0
        %v843 = vsel %vm805, %v781, 0
        %v846 = vsel %vm805, %v782, 0
        %v849 = vsel %vm805, %v783, 0
        %v852 = vsel %vm805, %v784, 0
        %v855 = vsel %vm805, %v785, 0
        %v858 = vsel %vm805, %v786, 0
        %v861 = vsel %vm805, %v787, 0
        %v864 = vsel %vm805, %v788, 0
        %v867 = vsel %vm805, %v789, 0
        %v870 = vsel %vm805, %v790, 0
        %v873 = vsel %vm805, %v791, 0
        %v876 = vsel %vm805, %v792, 0
        %v879 = vsel %vm805, %v793, 0
        %v882 = vsel %vm805, %v794, 0
        %v885 = vsel %vm805, %v795, 0
        %v888 = vsel %vm805, %v796, 0
        %v891 = vsel %vm805, %v797, 0
        %v894 = vsel %vm805, %v798, 0
        %v897 = vsel %vm805, %v799, 0
        %v900 = vsel %vm805, %v800, 0
        %v903 = vsel %vm805, %v801, 0
        %v906 = vsel %vm805, %v802, 0
        %v909 = vsel %vm805, %v803, 0
        %v912 = vsel %vm805, %v804, 0
        %vm914 = vcmask 1045504
        %v916 = vsel %vm914, %v623, 0
        %v919 = vsel %vm914, %v624, 0
        %921 = vmatprep.subr.bf16.mxu0 %v919
        %922 = vmatpush1.bf16.msra.mxu0 %v916
        %923 = vmatprep.subr.bf16.mxu0 0
        %924 = vmatpush1.bf16.msra.mxu0 0
        %925 = vmatprep.subr.bf16.mxu0 0
        %926 = vmatpush1.bf16.msra.mxu0 0
        %927 = vmatprep.subr.bf16.mxu0 0
        %928 = vmatpush1.bf16.msra.mxu0 0
        %929 = vmatprep.subr.bf16.mxu0 0
        %930 = vmatpush1.bf16.msra.mxu0 0
        %931 = vmatprep.subr.bf16.mxu0 0
        %932 = vmatpush1.bf16.msra.mxu0 0
        %933 = vmatprep.subr.bf16.mxu0 0
        %934 = vmatpush1.bf16.msra.mxu0 0
        %935 = vmatprep.subr.bf16.mxu0 0
        %936 = vmatpush1.bf16.msra.mxu0 0
        %937 = vmatprep.subr.bf16.mxu0 0
        %938 = vmatpush1.bf16.msra.mxu0 0
        %939 = vmatprep.subr.bf16.mxu0 0
        %940 = vmatpush1.bf16.msra.mxu0 0
        %941 = vmatprep.subr.bf16.mxu0 0
        %942 = vmatpush1.bf16.msra.mxu0 0
        %943 = vmatprep.subr.bf16.mxu0 0
        %944 = vmatpush1.bf16.msra.mxu0 0
        %945 = vmatprep.subr.bf16.mxu0 0
        %946 = vmatpush1.bf16.msra.mxu0 0
        %947 = vmatprep.subr.bf16.mxu0 0
        %948 = vmatpush1.bf16.msra.mxu0 0
        %949 = vmatprep.subr.bf16.mxu0 0
        %950 = vmatpush1.bf16.msra.mxu0 0
        %951 = vmatprep.subr.bf16.mxu0 0
        %952 = vmatpush1.bf16.msra.mxu0 0
        %953 = vmatprep.mubr.bf16.mxu0 0
        %954 = vmatmul.mubr.bf16.gmra.mrb[0].mxu0 %v807
        %v955 = vpop.f32.mrb[0].mxu0
        %v956 = vadd.f32 0.0, %v955
        %v957 = vpop.f32.mrb[0].mxu0
        %v958 = vadd.f32 0.0, %v957
        %v959 = vpop.f32.mrb[0].mxu0
        %v960 = vadd.f32 0.0, %v959
        %v961 = vpop.f32.mrb[0].mxu0
        %v962 = vadd.f32 0.0, %v961
        %963 = vmatprep.mubr.bf16.mxu0 0
        %964 = vmatmul.mubr.bf16.gmra.mrb[0].mxu0 %v810
        %v965 = vpop.f32.mrb[0].mxu0
        %v966 = vadd.f32 0.0, %v965
        %v967 = vpop.f32.mrb[0].mxu0
        %v968 = vadd.f32 0.0, %v967
        %v969 = vpop.f32.mrb[0].mxu0
        %v970 = vadd.f32 0.0, %v969
        %v971 = vpop.f32.mrb[0].mxu0
        %v972 = vadd.f32 0.0, %v971
        %973 = vmatprep.mubr.bf16.mxu0 0
        %974 = vmatmul.mubr.bf16.gmra.mrb[0].mxu0 %v813
        %v975 = vpop.f32.mrb[0].mxu0
        %v976 = vadd.f32 0.0, %v975
        %v977 = vpop.f32.mrb[0].mxu0
        %v978 = vadd.f32 0.0, %v977
        %v979 = vpop.f32.mrb[0].mxu0
        %v980 = vadd.f32 0.0, %v979
        %v981 = vpop.f32.mrb[0].mxu0
        %v982 = vadd.f32 0.0, %v981
        %983 = vmatprep.mubr.bf16.mxu0 0
        %984 = vmatmul.mubr.bf16.gmra.mrb[0].mxu0 %v816
        %v985 = vpop.f32.mrb[0].mxu0
        %v986 = vadd.f32 0.0, %v985
        %v987 = vpop.f32.mrb[0].mxu0
        %v988 = vadd.f32 0.0, %v987
        %v989 = vpop.f32.mrb[0].mxu0
        %v990 = vadd.f32 0.0, %v989
        %v991 = vpop.f32.mrb[0].mxu0
        %v992 = vadd.f32 0.0, %v991
        %993 = vmatprep.mubr.bf16.mxu0 0
        %994 = vmatmul.mubr.bf16.gmra.mrb[0].mxu0 %v819
        %v995 = vpop.f32.mrb[0].mxu0
        %v996 = vadd.f32 0.0, %v995
        %v997 = vpop.f32.mrb[0].mxu0
        %v998 = vadd.f32 0.0, %v997
        %v999 = vpop.f32.mrb[0].mxu0
        %v1000 = vadd.f32 0.0, %v999
        %v1001 = vpop.f32.mrb[0].mxu0
        %v1002 = vadd.f32 0.0, %v1001
        %1003 = vmatprep.mubr.bf16.mxu0 0
        %1004 = vmatmul.mubr.bf16.gmra.mrb[0].mxu0 %v822
        %v1005 = vpop.f32.mrb[0].mxu0
        %v1006 = vadd.f32 0.0, %v1005
        %v1007 = vpop.f32.mrb[0].mxu0
        %v1008 = vadd.f32 0.0, %v1007
        %v1009 = vpop.f32.mrb[0].mxu0
        %v1010 = vadd.f32 0.0, %v1009
        %v1011 = vpop.f32.mrb[0].mxu0
        %v1012 = vadd.f32 0.0, %v1011
        %1013 = vmatprep.mubr.bf16.mxu0 0
        %1014 = vmatmul.mubr.bf16.gmra.mrb[0].mxu0 %v825
        %v1015 = vpop.f32.mrb[0].mxu0
        %v1016 = vadd.f32 0.0, %v1015
        %v1017 = vpop.f32.mrb[0].mxu0
        %v1018 = vadd.f32 0.0, %v1017
        %v1019 = vpop.f32.mrb[0].mxu0
        %v1020 = vadd.f32 0.0, %v1019
        %v1021 = vpop.f32.mrb[0].mxu0
        %v1022 = vadd.f32 0.0, %v1021
        %1023 = vmatprep.mubr.bf16.mxu0 0
        %1024 = vmatmul.mubr.bf16.gmra.mrb[0].mxu0 %v828
        %v1025 = vpop.f32.mrb[0].mxu0
        %v1026 = vadd.f32 0.0, %v1025
        %v1027 = vpop.f32.mrb[0].mxu0
        %v1028 = vadd.f32 0.0, %v1027
        %v1029 = vpop.f32.mrb[0].mxu0
        %v1030 = vadd.f32 0.0, %v1029
        %v1031 = vpop.f32.mrb[0].mxu0
        %v1032 = vadd.f32 0.0, %v1031
        %1033 = vmatprep.mubr.bf16.mxu0 0
        %1034 = vmatmul.mubr.bf16.gmra.mrb[0].mxu0 %v831
        %v1035 = vpop.f32.mrb[0].mxu0
        %v1036 = vadd.f32 0.0, %v1035
        %v1037 = vpop.f32.mrb[0].mxu0
        %v1038 = vadd.f32 0.0, %v1037
        %v1039 = vpop.f32.mrb[0].mxu0
        %v1040 = vadd.f32 0.0, %v1039
        %v1041 = vpop.f32.mrb[0].mxu0
        %v1042 = vadd.f32 0.0, %v1041
        %1043 = vmatprep.mubr.bf16.mxu0 0
        %1044 = vmatmul.mubr.bf16.gmra.mrb[0].mxu0 %v834
        %v1045 = vpop.f32.mrb[0].mxu0
        %v1046 = vadd.f32 0.0, %v1045
        %v1047 = vpop.f32.mrb[0].mxu0
        %v1048 = vadd.f32 0.0, %v1047
        %v1049 = vpop.f32.mrb[0].mxu0
        %v1050 = vadd.f32 0.0, %v1049
        %v1051 = vpop.f32.mrb[0].mxu0
        %v1052 = vadd.f32 0.0, %v1051
        %1053 = vmatprep.mubr.bf16.mxu0 0
        %1054 = vmatmul.mubr.bf16.gmra.mrb[0].mxu0 %v837
        %v1055 = vpop.f32.mrb[0].mxu0
        %v1056 = vadd.f32 0.0, %v1055
        %v1057 = vpop.f32.mrb[0].mxu0
        %v1058 = vadd.f32 0.0, %v1057
        %v1059 = vpop.f32.mrb[0].mxu0
        %v1060 = vadd.f32 0.0, %v1059
        %v1061 = vpop.f32.mrb[0].mxu0
        %v1062 = vadd.f32 0.0, %v1061
        %1063 = vmatprep.mubr.bf16.mxu0 0
        %1064 = vmatmul.mubr.bf16.gmra.mrb[0].mxu0 %v840
        %v1065 = vpop.f32.mrb[0].mxu0
        %v1066 = vadd.f32 0.0, %v1065
        %v1067 = vpop.f32.mrb[0].mxu0
        %v1068 = vadd.f32 0.0, %v1067
        %v1069 = vpop.f32.mrb[0].mxu0
        %v1070 = vadd.f32 0.0, %v1069
        %v1071 = vpop.f32.mrb[0].mxu0
        %v1072 = vadd.f32 0.0, %v1071
        %1073 = vmatprep.mubr.bf16.mxu0 0
        %1074 = vmatmul.mubr.bf16.gmra.mrb[0].mxu0 %v843
        %v1075 = vpop.f32.mrb[0].mxu0
        %v1076 = vadd.f32 0.0, %v1075
        %v1077 = vpop.f32.mrb[0].mxu0
        %v1078 = vadd.f32 0.0, %v1077
        %v1079 = vpop.f32.mrb[0].mxu0
        %v1080 = vadd.f32 0.0, %v1079
        %v1081 = vpop.f32.mrb[0].mxu0
        %v1082 = vadd.f32 0.0, %v1081
        %1083 = vmatprep.mubr.bf16.mxu0 0
        %1084 = vmatmul.mubr.bf16.gmra.mrb[0].mxu0 %v846
        %v1085 = vpop.f32.mrb[0].mxu0
        %v1086 = vadd.f32 0.0, %v1085
        %v1087 = vpop.f32.mrb[0].mxu0
        %v1088 = vadd.f32 0.0, %v1087
        %v1089 = vpop.f32.mrb[0].mxu0
        %v1090 = vadd.f32 0.0, %v1089
        %v1091 = vpop.f32.mrb[0].mxu0
        %v1092 = vadd.f32 0.0, %v1091
        %1093 = vmatprep.mubr.bf16.mxu0 0
        %1094 = vmatmul.mubr.bf16.gmra.mrb[0].mxu0 %v849
        %v1095 = vpop.f32.mrb[0].mxu0
        %v1096 = vadd.f32 0.0, %v1095
        %v1097 = vpop.f32.mrb[0].mxu0
        %v1098 = vadd.f32 0.0, %v1097
        %v1099 = vpop.f32.mrb[0].mxu0
        %v1100 = vadd.f32 0.0, %v1099
        %v1101 = vpop.f32.mrb[0].mxu0
        %v1102 = vadd.f32 0.0, %v1101
        %1103 = vmatprep.mubr.bf16.mxu0 0
        %1104 = vmatmul.mubr.bf16.gmra.mrb[0].mxu0 %v852
        %v1105 = vpop.f32.mrb[0].mxu0
        %v1106 = vadd.f32 0.0, %v1105
        %v1107 = vpop.f32.mrb[0].mxu0
        %v1108 = vadd.f32 0.0, %v1107
        %v1109 = vpop.f32.mrb[0].mxu0
        %v1110 = vadd.f32 0.0, %v1109
        %v1111 = vpop.f32.mrb[0].mxu0
        %v1112 = vadd.f32 0.0, %v1111
        %1113 = vmatprep.mubr.bf16.mxu0 0
        %1114 = vmatmul.mubr.bf16.gmra.mrb[0].mxu0 %v855
        %v1115 = vpop.f32.mrb[0].mxu0
        %v1116 = vadd.f32 0.0, %v1115
        %v1117 = vpop.f32.mrb[0].mxu0
        %v1118 = vadd.f32 0.0, %v1117
        %v1119 = vpop.f32.mrb[0].mxu0
        %v1120 = vadd.f32 0.0, %v1119
        %v1121 = vpop.f32.mrb[0].mxu0
        %v1122 = vadd.f32 0.0, %v1121
        %1123 = vmatprep.mubr.bf16.mxu0 0
        %1124 = vmatmul.mubr.bf16.gmra.mrb[0].mxu0 %v858
        %v1125 = vpop.f32.mrb[0].mxu0
        %v1126 = vadd.f32 0.0, %v1125
        %v1127 = vpop.f32.mrb[0].mxu0
        %v1128 = vadd.f32 0.0, %v1127
        %v1129 = vpop.f32.mrb[0].mxu0
        %v1130 = vadd.f32 0.0, %v1129
        %v1131 = vpop.f32.mrb[0].mxu0
        %v1132 = vadd.f32 0.0, %v1131
        %1133 = vmatprep.mubr.bf16.mxu0 0
        %1134 = vmatmul.mubr.bf16.gmra.mrb[0].mxu0 %v861
        %v1135 = vpop.f32.mrb[0].mxu0
        %v1136 = vadd.f32 0.0, %v1135
        %v1137 = vpop.f32.mrb[0].mxu0
        %v1138 = vadd.f32 0.0, %v1137
        %v1139 = vpop.f32.mrb[0].mxu0
        %v1140 = vadd.f32 0.0, %v1139
        %v1141 = vpop.f32.mrb[0].mxu0
        %v1142 = vadd.f32 0.0, %v1141
        %1143 = vmatprep.mubr.bf16.mxu0 0
        %1144 = vmatmul.mubr.bf16.gmra.mrb[0].mxu0 %v864
        %v1145 = vpop.f32.mrb[0].mxu0
        %v1146 = vadd.f32 0.0, %v1145
        %v1147 = vpop.f32.mrb[0].mxu0
        %v1148 = vadd.f32 0.0, %v1147
        %v1149 = vpop.f32.mrb[0].mxu0
        %v1150 = vadd.f32 0.0, %v1149
        %v1151 = vpop.f32.mrb[0].mxu0
        %v1152 = vadd.f32 0.0, %v1151
        %1153 = vmatprep.mubr.bf16.mxu0 0
        %1154 = vmatmul.mubr.bf16.gmra.mrb[0].mxu0 %v867
        %v1155 = vpop.f32.mrb[0].mxu0
        %v1156 = vadd.f32 0.0, %v1155
        %v1157 = vpop.f32.mrb[0].mxu0
        %v1158 = vadd.f32 0.0, %v1157
        %v1159 = vpop.f32.mrb[0].mxu0
        %v1160 = vadd.f32 0.0, %v1159
        %v1161 = vpop.f32.mrb[0].mxu0
        %v1162 = vadd.f32 0.0, %v1161
        %1163 = vmatprep.mubr.bf16.mxu0 0
        %1164 = vmatmul.mubr.bf16.gmra.mrb[0].mxu0 %v870
        %v1165 = vpop.f32.mrb[0].mxu0
        %v1166 = vadd.f32 0.0, %v1165
        %v1167 = vpop.f32.mrb[0].mxu0
        %v1168 = vadd.f32 0.0, %v1167
        %v1169 = vpop.f32.mrb[0].mxu0
        %v1170 = vadd.f32 0.0, %v1169
        %v1171 = vpop.f32.mrb[0].mxu0
        %v1172 = vadd.f32 0.0, %v1171
        %1173 = vmatprep.mubr.bf16.mxu0 0
        %1174 = vmatmul.mubr.bf16.gmra.mrb[0].mxu0 %v873
        %v1175 = vpop.f32.mrb[0].mxu0
        %v1176 = vadd.f32 0.0, %v1175
        %v1177 = vpop.f32.mrb[0].mxu0
        %v1178 = vadd.f32 0.0, %v1177
        %v1179 = vpop.f32.mrb[0].mxu0
        %v1180 = vadd.f32 0.0, %v1179
        %v1181 = vpop.f32.mrb[0].mxu0
        %v1182 = vadd.f32 0.0, %v1181
        %1183 = vmatprep.mubr.bf16.mxu0 0
        %1184 = vmatmul.mubr.bf16.gmra.mrb[0].mxu0 %v876
        %v1185 = vpop.f32.mrb[0].mxu0
        %v1186 = vadd.f32 0.0, %v1185
        %v1187 = vpop.f32.mrb[0].mxu0
        %v1188 = vadd.f32 0.0, %v1187
        %v1189 = vpop.f32.mrb[0].mxu0
        %v1190 = vadd.f32 0.0, %v1189
        %v1191 = vpop.f32.mrb[0].mxu0
        %v1192 = vadd.f32 0.0, %v1191
        %1193 = vmatprep.mubr.bf16.mxu0 0
        %1194 = vmatmul.mubr.bf16.gmra.mrb[0].mxu0 %v879
        %v1195 = vpop.f32.mrb[0].mxu0
        %v1196 = vadd.f32 0.0, %v1195
        %v1197 = vpop.f32.mrb[0].mxu0
        %v1198 = vadd.f32 0.0, %v1197
        %v1199 = vpop.f32.mrb[0].mxu0
        %v1200 = vadd.f32 0.0, %v1199
        %v1201 = vpop.f32.mrb[0].mxu0
        %v1202 = vadd.f32 0.0, %v1201
        %1203 = vmatprep.mubr.bf16.mxu0 0
        %1204 = vmatmul.mubr.bf16.gmra.mrb[0].mxu0 %v882
        %v1205 = vpop.f32.mrb[0].mxu0
        %v1206 = vadd.f32 0.0, %v1205
        %v1207 = vpop.f32.mrb[0].mxu0
        %v1208 = vadd.f32 0.0, %v1207
        %v1209 = vpop.f32.mrb[0].mxu0
        %v1210 = vadd.f32 0.0, %v1209
        %v1211 = vpop.f32.mrb[0].mxu0
        %v1212 = vadd.f32 0.0, %v1211
        %1213 = vmatprep.mubr.bf16.mxu0 0
        %1214 = vmatmul.mubr.bf16.gmra.mrb[0].mxu0 %v885
        %v1215 = vpop.f32.mrb[0].mxu0
        %v1216 = vadd.f32 0.0, %v1215
        %v1217 = vpop.f32.mrb[0].mxu0
        %v1218 = vadd.f32 0.0, %v1217
        %v1219 = vpop.f32.mrb[0].mxu0
        %v1220 = vadd.f32 0.0, %v1219
        %v1221 = vpop.f32.mrb[0].mxu0
        %v1222 = vadd.f32 0.0, %v1221
        %1223 = vmatprep.mubr.bf16.mxu0 0
        %1224 = vmatmul.mubr.bf16.gmra.mrb[0].mxu0 %v888
        %v1225 = vpop.f32.mrb[0].mxu0
        %v1226 = vadd.f32 0.0, %v1225
        %v1227 = vpop.f32.mrb[0].mxu0
        %v1228 = vadd.f32 0.0, %v1227
        %v1229 = vpop.f32.mrb[0].mxu0
        %v1230 = vadd.f32 0.0, %v1229
        %v1231 = vpop.f32.mrb[0].mxu0
        %v1232 = vadd.f32 0.0, %v1231
        %1233 = vmatprep.mubr.bf16.mxu0 0
        %1234 = vmatmul.mubr.bf16.gmra.mrb[0].mxu0 %v891
        %v1235 = vpop.f32.mrb[0].mxu0
        %v1236 = vadd.f32 0.0, %v1235
        %v1237 = vpop.f32.mrb[0].mxu0
        %v1238 = vadd.f32 0.0, %v1237
        %v1239 = vpop.f32.mrb[0].mxu0
        %v1240 = vadd.f32 0.0, %v1239
        %v1241 = vpop.f32.mrb[0].mxu0
        %v1242 = vadd.f32 0.0, %v1241
        %1243 = vmatprep.mubr.bf16.mxu0 0
        %1244 = vmatmul.mubr.bf16.gmra.mrb[0].mxu0 %v894
        %v1245 = vpop.f32.mrb[0].mxu0
        %v1246 = vadd.f32 0.0, %v1245
        %v1247 = vpop.f32.mrb[0].mxu0
        %v1248 = vadd.f32 0.0, %v1247
        %v1249 = vpop.f32.mrb[0].mxu0
        %v1250 = vadd.f32 0.0, %v1249
        %v1251 = vpop.f32.mrb[0].mxu0
        %v1252 = vadd.f32 0.0, %v1251
        %1253 = vmatprep.mubr.bf16.mxu0 0
        %1254 = vmatmul.mubr.bf16.gmra.mrb[0].mxu0 %v897
        %v1255 = vpop.f32.mrb[0].mxu0
        %v1256 = vadd.f32 0.0, %v1255
        %v1257 = vpop.f32.mrb[0].mxu0
        %v1258 = vadd.f32 0.0, %v1257
        %v1259 = vpop.f32.mrb[0].mxu0
        %v1260 = vadd.f32 0.0, %v1259
        %v1261 = vpop.f32.mrb[0].mxu0
        %v1262 = vadd.f32 0.0, %v1261
        %1263 = vmatprep.mubr.bf16.mxu0 0
        %1264 = vmatmul.mubr.bf16.gmra.mrb[0].mxu0 %v900
        %v1265 = vpop.f32.mrb[0].mxu0
        %v1266 = vadd.f32 0.0, %v1265
        %v1267 = vpop.f32.mrb[0].mxu0
        %v1268 = vadd.f32 0.0, %v1267
        %v1269 = vpop.f32.mrb[0].mxu0
        %v1270 = vadd.f32 0.0, %v1269
        %v1271 = vpop.f32.mrb[0].mxu0
        %v1272 = vadd.f32 0.0, %v1271
        %1273 = vmatprep.mubr.bf16.mxu0 0
        %1274 = vmatmul.mubr.bf16.gmra.mrb[0].mxu0 %v903
        %v1275 = vpop.f32.mrb[0].mxu0
        %v1276 = vadd.f32 0.0, %v1275
        %v1277 = vpop.f32.mrb[0].mxu0
        %v1278 = vadd.f32 0.0, %v1277
        %v1279 = vpop.f32.mrb[0].mxu0
        %v1280 = vadd.f32 0.0, %v1279
        %v1281 = vpop.f32.mrb[0].mxu0
        %v1282 = vadd.f32 0.0, %v1281
        %1283 = vmatprep.mubr.bf16.mxu0 0
        %1284 = vmatmul.mubr.bf16.gmra.mrb[0].mxu0 %v906
        %v1285 = vpop.f32.mrb[0].mxu0
        %v1286 = vadd.f32 0.0, %v1285
        %v1287 = vpop.f32.mrb[0].mxu0
        %v1288 = vadd.f32 0.0, %v1287
        %v1289 = vpop.f32.mrb[0].mxu0
        %v1290 = vadd.f32 0.0, %v1289
        %v1291 = vpop.f32.mrb[0].mxu0
        %v1292 = vadd.f32 0.0, %v1291
        %1293 = vmatprep.mubr.bf16.mxu0 0
        %1294 = vmatmul.mubr.bf16.gmra.mrb[0].mxu0 %v909
        %v1295 = vpop.f32.mrb[0].mxu0
        %v1296 = vadd.f32 0.0, %v1295
        %v1297 = vpop.f32.mrb[0].mxu0
        %v1298 = vadd.f32 0.0, %v1297
        %v1299 = vpop.f32.mrb[0].mxu0
        %v1300 = vadd.f32 0.0, %v1299
        %v1301 = vpop.f32.mrb[0].mxu0
        %v1302 = vadd.f32 0.0, %v1301
        %1303 = vmatprep.mubr.bf16.mxu0 0
        %1304 = vmatmul.mubr.bf16.gmra.mrb[0].mxu0 %v912
        %v1305 = vpop.f32.mrb[0].mxu0
        %v1306 = vadd.f32 0.0, %v1305
        %v1307 = vpop.f32.mrb[0].mxu0
        %v1308 = vadd.f32 0.0, %v1307
        %v1309 = vpop.f32.mrb[0].mxu0
        %v1310 = vadd.f32 0.0, %v1309
        %v1311 = vpop.f32.mrb[0].mxu0
        %v1312 = vadd.f32 0.0, %v1311
        %1313 = vdwg.mxu0
        %v1315 = vlaneseq
        %v1316 = vshrl.u32 %v1315, 7
        %v1317 = vsub.s32 0, %v1316
        %v1318 = vrot.slane %v550, %v1317
        %v1319 = vlaneseq
        %v1320 = vshrl.u32 %v1319, 7
        %v1321 = vsub.s32 4, %v1320
        %v1322 = vrot.slane %v550, %v1321
        %v1325 = vlaneseq
        %v1326 = vshrl.u32 %v1325, 7
        %v1327 = vsub.s32 0, %v1326
        %v1328 = vrot.slane %v1318, %v1327
        %v1329 = vlaneseq
        %v1330 = vshrl.u32 %v1329, 7
        %v1331 = vsub.s32 0, %v1330
        %v1332 = vrot.slane %v1322, %v1331
        %1335 = vrot.lane.b32.xlu0 %v1328, 15
        %v1336 = vpop.permute.xlu0 %1335
        %1337 = vrot.lane.b32.xlu0 %v1332, 15
        %v1338 = vpop.permute.xlu0 %1337
        %vm1339 = vcmask 121856
        %v1340 = vsel %vm1339, %v1336, %v1338
        %v1343 = vmul.f32 %v956, %v1336
        %v1344 = vmul.f32 %v958, %v1340
        %v1345 = vmul.f32 %v960, %v1336
        %v1346 = vmul.f32 %v962, %v1340
        %v1347 = vmul.f32 %v966, %v1336
        %v1348 = vmul.f32 %v968, %v1340
        %v1349 = vmul.f32 %v970, %v1336
        %v1350 = vmul.f32 %v972, %v1340
        %v1351 = vmul.f32 %v976, %v1336
        %v1352 = vmul.f32 %v978, %v1340
        %v1353 = vmul.f32 %v980, %v1336
        %v1354 = vmul.f32 %v982, %v1340
        %v1355 = vmul.f32 %v986, %v1336
        %v1356 = vmul.f32 %v988, %v1340
        %v1357 = vmul.f32 %v990, %v1336
        %v1358 = vmul.f32 %v992, %v1340
        %v1359 = vlaneseq
        %v1360 = vshrl.u32 %v1359, 7
        %v1361 = vsub.s32 1, %v1360
        %v1362 = vrot.slane %v550, %v1361
        %v1363 = vlaneseq
        %v1364 = vshrl.u32 %v1363, 7
        %v1365 = vsub.s32 5, %v1364
        %v1366 = vrot.slane %v550, %v1365
        %v1369 = vlaneseq
        %v1370 = vshrl.u32 %v1369, 7
        %v1371 = vsub.s32 1, %v1370
        %v1372 = vrot.slane %v1362, %v1371
        %v1373 = vlaneseq
        %v1374 = vshrl.u32 %v1373, 7
        %v1375 = vsub.s32 1, %v1374
        %v1376 = vrot.slane %v1366, %v1375
        %1379 = vrot.lane.b32.xlu0 %v1372, 17
        %v1380 = vpop.permute.xlu0 %1379
        %1381 = vrot.lane.b32.xlu0 %v1376, 17
        %v1382 = vpop.permute.xlu0 %1381
        %vm1383 = vcmask 138240
        %v1384 = vsel %vm1383, %v1380, %v1382
        %v1387 = vmul.f32 %v1036, %v1380
        %v1388 = vmul.f32 %v1038, %v1384
        %v1389 = vmul.f32 %v1040, %v1380
        %v1390 = vmul.f32 %v1042, %v1384
        %v1391 = vmul.f32 %v1046, %v1380
        %v1392 = vmul.f32 %v1048, %v1384
        %v1393 = vmul.f32 %v1050, %v1380
        %v1394 = vmul.f32 %v1052, %v1384
        %v1395 = vmul.f32 %v1056, %v1380
        %v1396 = vmul.f32 %v1058, %v1384
        %v1397 = vmul.f32 %v1060, %v1380
        %v1398 = vmul.f32 %v1062, %v1384
        %v1399 = vmul.f32 %v1066, %v1380
        %v1400 = vmul.f32 %v1068, %v1384
        %v1401 = vmul.f32 %v1070, %v1380
        %v1402 = vmul.f32 %v1072, %v1384
        %1403 = vrot.lane.b32.xlu0 %v1328, 31
        %v1404 = vpop.permute.xlu0 %1403
        %1405 = vrot.lane.b32.xlu0 %v1332, 31
        %v1406 = vpop.permute.xlu0 %1405
        %vm1407 = vcmask 252928
        %v1408 = vsel %vm1407, %v1404, %v1406
        %v1411 = vmul.f32 %v1076, %v1404
        %v1412 = vmul.f32 %v1078, %v1408
        %v1413 = vmul.f32 %v1080, %v1404
        %v1414 = vmul.f32 %v1082, %v1408
        %v1415 = vmul.f32 %v1086, %v1404
        %v1416 = vmul.f32 %v1088, %v1408
        %v1417 = vmul.f32 %v1090, %v1404
        %v1418 = vmul.f32 %v1092, %v1408
        %v1419 = vmul.f32 %v1096, %v1404
        %v1420 = vmul.f32 %v1098, %v1408
        %v1421 = vmul.f32 %v1100, %v1404
        %v1422 = vmul.f32 %v1102, %v1408
        %v1423 = vmul.f32 %v1106, %v1404
        %v1424 = vmul.f32 %v1108, %v1408
        %v1425 = vmul.f32 %v1110, %v1404
        %v1426 = vmul.f32 %v1112, %v1408
        %1427 = vrot.lane.b32.xlu0 %v1372, 33
        %v1428 = vpop.permute.xlu0 %1427
        %1429 = vrot.lane.b32.xlu0 %v1376, 33
        %v1430 = vpop.permute.xlu0 %1429
        %vm1431 = vcmask 269312
        %v1432 = vsel %vm1431, %v1428, %v1430
        %v1435 = vmul.f32 %v1156, %v1428
        %v1436 = vmul.f32 %v1158, %v1432
        %v1437 = vmul.f32 %v1160, %v1428
        %v1438 = vmul.f32 %v1162, %v1432
        %v1439 = vmul.f32 %v1166, %v1428
        %v1440 = vmul.f32 %v1168, %v1432
        %v1441 = vmul.f32 %v1170, %v1428
        %v1442 = vmul.f32 %v1172, %v1432
        %v1443 = vmul.f32 %v1176, %v1428
        %v1444 = vmul.f32 %v1178, %v1432
        %v1445 = vmul.f32 %v1180, %v1428
        %v1446 = vmul.f32 %v1182, %v1432
        %v1447 = vmul.f32 %v1186, %v1428
        %v1448 = vmul.f32 %v1188, %v1432
        %v1449 = vmul.f32 %v1190, %v1428
        %v1450 = vmul.f32 %v1192, %v1432
        %1451 = vrot.lane.b32.xlu0 %v1328, 47
        %v1452 = vpop.permute.xlu0 %1451
        %1453 = vrot.lane.b32.xlu0 %v1332, 47
        %v1454 = vpop.permute.xlu0 %1453
        %vm1455 = vcmask 384000
        %v1456 = vsel %vm1455, %v1452, %v1454
        %v1459 = vmul.f32 %v1196, %v1452
        %v1460 = vmul.f32 %v1198, %v1456
        %v1461 = vmul.f32 %v1200, %v1452
        %v1462 = vmul.f32 %v1202, %v1456
        %v1463 = vmul.f32 %v1206, %v1452
        %v1464 = vmul.f32 %v1208, %v1456
        %v1465 = vmul.f32 %v1210, %v1452
        %v1466 = vmul.f32 %v1212, %v1456
        %v1467 = vmul.f32 %v1216, %v1452
        %v1468 = vmul.f32 %v1218, %v1456
        %v1469 = vmul.f32 %v1220, %v1452
        %v1470 = vmul.f32 %v1222, %v1456
        %v1471 = vmul.f32 %v1226, %v1452
        %v1472 = vmul.f32 %v1228, %v1456
        %v1473 = vmul.f32 %v1230, %v1452
        %v1474 = vmul.f32 %v1232, %v1456
        %1475 = vrot.lane.b32.xlu0 %v1372, 49
        %v1476 = vpop.permute.xlu0 %1475
        %1477 = vrot.lane.b32.xlu0 %v1376, 49
        %v1478 = vpop.permute.xlu0 %1477
        %vm1479 = vcmask 400384
        %v1480 = vsel %vm1479, %v1476, %v1478
        %v1483 = vmul.f32 %v1276, %v1476
        %v1484 = vmul.f32 %v1278, %v1480
        %v1485 = vmul.f32 %v1280, %v1476
        %v1486 = vmul.f32 %v1282, %v1480
        %v1487 = vmul.f32 %v1286, %v1476
        %v1488 = vmul.f32 %v1288, %v1480
        %v1489 = vmul.f32 %v1290, %v1476
        %v1490 = vmul.f32 %v1292, %v1480
        %v1491 = vmul.f32 %v1296, %v1476
        %v1492 = vmul.f32 %v1298, %v1480
        %v1493 = vmul.f32 %v1300, %v1476
        %v1494 = vmul.f32 %v1302, %v1480
        %v1495 = vmul.f32 %v1306, %v1476
        %v1496 = vmul.f32 %v1308, %v1480
        %v1497 = vmul.f32 %v1310, %v1476
        %v1498 = vmul.f32 %v1312, %v1480
        %1515 = vrot.lane.b32.xlu0 %v996, 127
        %v1516 = vpop.permute.xlu0 %1515
        %1517 = vrot.lane.b32.xlu0 %v998, 127
        %v1518 = vpop.permute.xlu0 %1517
        %1519 = vrot.lane.b32.xlu0 %v1000, 127
        %v1520 = vpop.permute.xlu0 %1519
        %1521 = vrot.lane.b32.xlu0 %v1002, 127
        %v1522 = vpop.permute.xlu0 %1521
        %1523 = vrot.lane.b32.xlu0 %v1006, 127
        %v1524 = vpop.permute.xlu0 %1523
        %1525 = vrot.lane.b32.xlu0 %v1008, 127
        %v1526 = vpop.permute.xlu0 %1525
        %1527 = vrot.lane.b32.xlu0 %v1010, 127
        %v1528 = vpop.permute.xlu0 %1527
        %1529 = vrot.lane.b32.xlu0 %v1012, 127
        %v1530 = vpop.permute.xlu0 %1529
        %1531 = vrot.lane.b32.xlu0 %v1016, 127
        %v1532 = vpop.permute.xlu0 %1531
        %1533 = vrot.lane.b32.xlu0 %v1018, 127
        %v1534 = vpop.permute.xlu0 %1533
        %1535 = vrot.lane.b32.xlu0 %v1020, 127
        %v1536 = vpop.permute.xlu0 %1535
        %1537 = vrot.lane.b32.xlu0 %v1022, 127
        %v1538 = vpop.permute.xlu0 %1537
        %1539 = vrot.lane.b32.xlu0 %v1026, 127
        %v1540 = vpop.permute.xlu0 %1539
        %1541 = vrot.lane.b32.xlu0 %v1028, 127
        %v1542 = vpop.permute.xlu0 %1541
        %1543 = vrot.lane.b32.xlu0 %v1030, 127
        %v1544 = vpop.permute.xlu0 %1543
        %1545 = vrot.lane.b32.xlu0 %v1032, 127
        %v1546 = vpop.permute.xlu0 %1545
        %vm1547 = vcmask 1039360
        %v1548 = vsel %vm1547, %v1516, %v1518
        %v1549 = vsel %vm1547, %v1520, %v1522
        %v1550 = vsel %vm1547, %v1524, %v1526
        %v1551 = vsel %vm1547, %v1528, %v1530
        %v1552 = vsel %vm1547, %v1532, %v1534
        %v1553 = vsel %vm1547, %v1536, %v1538
        %v1554 = vsel %vm1547, %v1540, %v1542
        %v1555 = vsel %vm1547, %v1544, %v1546
        %v1572 = vadd.f32 %v1343, %v1548
        %v1573 = vadd.f32 %v1344, %v1518
        %v1574 = vadd.f32 %v1345, %v1549
        %v1575 = vadd.f32 %v1346, %v1522
        %v1576 = vadd.f32 %v1347, %v1550
        %v1577 = vadd.f32 %v1348, %v1526
        %v1578 = vadd.f32 %v1349, %v1551
        %v1579 = vadd.f32 %v1350, %v1530
        %v1580 = vadd.f32 %v1351, %v1552
        %v1581 = vadd.f32 %v1352, %v1534
        %v1582 = vadd.f32 %v1353, %v1553
        %v1583 = vadd.f32 %v1354, %v1538
        %v1584 = vadd.f32 %v1355, %v1554
        %v1585 = vadd.f32 %v1356, %v1542
        %v1586 = vadd.f32 %v1357, %v1555
        %v1587 = vadd.f32 %v1358, %v1546
        %1604 = vrot.lane.b32.xlu0 %v1411, 114
        %v1605 = vpop.permute.xlu0 %1604
        %1606 = vrot.lane.b32.xlu0 %v1412, 114
        %v1607 = vpop.permute.xlu0 %1606
        %1608 = vrot.lane.b32.xlu0 %v1413, 114
        %v1609 = vpop.permute.xlu0 %1608
        %1610 = vrot.lane.b32.xlu0 %v1414, 114
        %v1611 = vpop.permute.xlu0 %1610
        %1612 = vrot.lane.b32.xlu0 %v1415, 114
        %v1613 = vpop.permute.xlu0 %1612
        %1614 = vrot.lane.b32.xlu0 %v1416, 114
        %v1615 = vpop.permute.xlu0 %1614
        %1616 = vrot.lane.b32.xlu0 %v1417, 114
        %v1617 = vpop.permute.xlu0 %1616
        %1618 = vrot.lane.b32.xlu0 %v1418, 114
        %v1619 = vpop.permute.xlu0 %1618
        %1620 = vrot.lane.b32.xlu0 %v1419, 114
        %v1621 = vpop.permute.xlu0 %1620
        %1622 = vrot.lane.b32.xlu0 %v1420, 114
        %v1623 = vpop.permute.xlu0 %1622
        %1624 = vrot.lane.b32.xlu0 %v1421, 114
        %v1625 = vpop.permute.xlu0 %1624
        %1626 = vrot.lane.b32.xlu0 %v1422, 114
        %v1627 = vpop.permute.xlu0 %1626
        %1628 = vrot.lane.b32.xlu0 %v1423, 114
        %v1629 = vpop.permute.xlu0 %1628
        %1630 = vrot.lane.b32.xlu0 %v1424, 114
        %v1631 = vpop.permute.xlu0 %1630
        %1632 = vrot.lane.b32.xlu0 %v1425, 114
        %v1633 = vpop.permute.xlu0 %1632
        %1634 = vrot.lane.b32.xlu0 %v1426, 114
        %v1635 = vpop.permute.xlu0 %1634
        %vm1636 = vcmask 932864
        %v1637 = vsel %vm1636, %v1605, %v1607
        %v1638 = vsel %vm1636, %v1609, %v1611
        %v1639 = vsel %vm1636, %v1613, %v1615
        %v1640 = vsel %vm1636, %v1617, %v1619
        %v1641 = vsel %vm1636, %v1621, %v1623
        %v1642 = vsel %vm1636, %v1625, %v1627
        %v1643 = vsel %vm1636, %v1629, %v1631
        %v1644 = vsel %vm1636, %v1633, %v1635
        %v1661 = vadd.f32 %v1387, %v1637
        %v1662 = vadd.f32 %v1388, %v1607
        %v1663 = vadd.f32 %v1389, %v1638
        %v1664 = vadd.f32 %v1390, %v1611
        %v1665 = vadd.f32 %v1391, %v1639
        %v1666 = vadd.f32 %v1392, %v1615
        %v1667 = vadd.f32 %v1393, %v1640
        %v1668 = vadd.f32 %v1394, %v1619
        %v1669 = vadd.f32 %v1395, %v1641
        %v1670 = vadd.f32 %v1396, %v1623
        %v1671 = vadd.f32 %v1397, %v1642
        %v1672 = vadd.f32 %v1398, %v1627
        %v1673 = vadd.f32 %v1399, %v1643
        %v1674 = vadd.f32 %v1400, %v1631
        %v1675 = vadd.f32 %v1401, %v1644
        %v1676 = vadd.f32 %v1402, %v1635
        %1693 = vrot.lane.b32.xlu0 %v1435, 127
        %v1694 = vpop.permute.xlu0 %1693
        %1695 = vrot.lane.b32.xlu0 %v1436, 127
        %v1696 = vpop.permute.xlu0 %1695
        %1697 = vrot.lane.b32.xlu0 %v1437, 127
        %v1698 = vpop.permute.xlu0 %1697
        %1699 = vrot.lane.b32.xlu0 %v1438, 127
        %v1700 = vpop.permute.xlu0 %1699
        %1701 = vrot.lane.b32.xlu0 %v1439, 127
        %v1702 = vpop.permute.xlu0 %1701
        %1703 = vrot.lane.b32.xlu0 %v1440, 127
        %v1704 = vpop.permute.xlu0 %1703
        %1705 = vrot.lane.b32.xlu0 %v1441, 127
        %v1706 = vpop.permute.xlu0 %1705
        %1707 = vrot.lane.b32.xlu0 %v1442, 127
        %v1708 = vpop.permute.xlu0 %1707
        %1709 = vrot.lane.b32.xlu0 %v1443, 127
        %v1710 = vpop.permute.xlu0 %1709
        %1711 = vrot.lane.b32.xlu0 %v1444, 127
        %v1712 = vpop.permute.xlu0 %1711
        %1713 = vrot.lane.b32.xlu0 %v1445, 127
        %v1714 = vpop.permute.xlu0 %1713
        %1715 = vrot.lane.b32.xlu0 %v1446, 127
        %v1716 = vpop.permute.xlu0 %1715
        %1717 = vrot.lane.b32.xlu0 %v1447, 127
        %v1718 = vpop.permute.xlu0 %1717
        %1719 = vrot.lane.b32.xlu0 %v1448, 127
        %v1720 = vpop.permute.xlu0 %1719
        %1721 = vrot.lane.b32.xlu0 %v1449, 127
        %v1722 = vpop.permute.xlu0 %1721
        %1723 = vrot.lane.b32.xlu0 %v1450, 127
        %v1724 = vpop.permute.xlu0 %1723
        %v1725 = vsel %vm1547, %v1694, %v1696
        %v1726 = vsel %vm1547, %v1698, %v1700
        %v1727 = vsel %vm1547, %v1702, %v1704
        %v1728 = vsel %vm1547, %v1706, %v1708
        %v1729 = vsel %vm1547, %v1710, %v1712
        %v1730 = vsel %vm1547, %v1714, %v1716
        %v1731 = vsel %vm1547, %v1718, %v1720
        %v1732 = vsel %vm1547, %v1722, %v1724
        %v1749 = vadd.f32 %v1116, %v1725
        %v1750 = vadd.f32 %v1118, %v1696
        %v1751 = vadd.f32 %v1120, %v1726
        %v1752 = vadd.f32 %v1122, %v1700
        %v1753 = vadd.f32 %v1126, %v1727
        %v1754 = vadd.f32 %v1128, %v1704
        %v1755 = vadd.f32 %v1130, %v1728
        %v1756 = vadd.f32 %v1132, %v1708
        %v1757 = vadd.f32 %v1136, %v1729
        %v1758 = vadd.f32 %v1138, %v1712
        %v1759 = vadd.f32 %v1140, %v1730
        %v1760 = vadd.f32 %v1142, %v1716
        %v1761 = vadd.f32 %v1146, %v1731
        %v1762 = vadd.f32 %v1148, %v1720
        %v1763 = vadd.f32 %v1150, %v1732
        %v1764 = vadd.f32 %v1152, %v1724
        %1781 = vrot.lane.b32.xlu0 %v1236, 127
        %v1782 = vpop.permute.xlu0 %1781
        %1783 = vrot.lane.b32.xlu0 %v1238, 127
        %v1784 = vpop.permute.xlu0 %1783
        %1785 = vrot.lane.b32.xlu0 %v1240, 127
        %v1786 = vpop.permute.xlu0 %1785
        %1787 = vrot.lane.b32.xlu0 %v1242, 127
        %v1788 = vpop.permute.xlu0 %1787
        %1789 = vrot.lane.b32.xlu0 %v1246, 127
        %v1790 = vpop.permute.xlu0 %1789
        %1791 = vrot.lane.b32.xlu0 %v1248, 127
        %v1792 = vpop.permute.xlu0 %1791
        %1793 = vrot.lane.b32.xlu0 %v1250, 127
        %v1794 = vpop.permute.xlu0 %1793
        %1795 = vrot.lane.b32.xlu0 %v1252, 127
        %v1796 = vpop.permute.xlu0 %1795
        %1797 = vrot.lane.b32.xlu0 %v1256, 127
        %v1798 = vpop.permute.xlu0 %1797
        %1799 = vrot.lane.b32.xlu0 %v1258, 127
        %v1800 = vpop.permute.xlu0 %1799
        %1801 = vrot.lane.b32.xlu0 %v1260, 127
        %v1802 = vpop.permute.xlu0 %1801
        %1803 = vrot.lane.b32.xlu0 %v1262, 127
        %v1804 = vpop.permute.xlu0 %1803
        %1805 = vrot.lane.b32.xlu0 %v1266, 127
        %v1806 = vpop.permute.xlu0 %1805
        %1807 = vrot.lane.b32.xlu0 %v1268, 127
        %v1808 = vpop.permute.xlu0 %1807
        %1809 = vrot.lane.b32.xlu0 %v1270, 127
        %v1810 = vpop.permute.xlu0 %1809
        %1811 = vrot.lane.b32.xlu0 %v1272, 127
        %v1812 = vpop.permute.xlu0 %1811
        %v1813 = vsel %vm1547, %v1782, %v1784
        %v1814 = vsel %vm1547, %v1786, %v1788
        %v1815 = vsel %vm1547, %v1790, %v1792
        %v1816 = vsel %vm1547, %v1794, %v1796
        %v1817 = vsel %vm1547, %v1798, %v1800
        %v1818 = vsel %vm1547, %v1802, %v1804
        %v1819 = vsel %vm1547, %v1806, %v1808
        %v1820 = vsel %vm1547, %v1810, %v1812
        %v1837 = vadd.f32 %v1459, %v1813
        %v1838 = vadd.f32 %v1460, %v1784
        %v1839 = vadd.f32 %v1461, %v1814
        %v1840 = vadd.f32 %v1462, %v1788
        %v1841 = vadd.f32 %v1463, %v1815
        %v1842 = vadd.f32 %v1464, %v1792
        %v1843 = vadd.f32 %v1465, %v1816
        %v1844 = vadd.f32 %v1466, %v1796
        %v1845 = vadd.f32 %v1467, %v1817
        %v1846 = vadd.f32 %v1468, %v1800
        %v1847 = vadd.f32 %v1469, %v1818
        %v1848 = vadd.f32 %v1470, %v1804
        %v1849 = vadd.f32 %v1471, %v1819
        %v1850 = vadd.f32 %v1472, %v1808
        %v1851 = vadd.f32 %v1473, %v1820
        %v1852 = vadd.f32 %v1474, %v1812
        %1869 = vrot.lane.b32.xlu0 %v1661, 126
        %v1870 = vpop.permute.xlu0 %1869
        %1871 = vrot.lane.b32.xlu0 %v1662, 126
        %v1872 = vpop.permute.xlu0 %1871
        %1873 = vrot.lane.b32.xlu0 %v1663, 126
        %v1874 = vpop.permute.xlu0 %1873
        %1875 = vrot.lane.b32.xlu0 %v1664, 126
        %v1876 = vpop.permute.xlu0 %1875
        %1877 = vrot.lane.b32.xlu0 %v1665, 126
        %v1878 = vpop.permute.xlu0 %1877
        %1879 = vrot.lane.b32.xlu0 %v1666, 126
        %v1880 = vpop.permute.xlu0 %1879
        %1881 = vrot.lane.b32.xlu0 %v1667, 126
        %v1882 = vpop.permute.xlu0 %1881
        %1883 = vrot.lane.b32.xlu0 %v1668, 126
        %v1884 = vpop.permute.xlu0 %1883
        %1885 = vrot.lane.b32.xlu0 %v1669, 126
        %v1886 = vpop.permute.xlu0 %1885
        %1887 = vrot.lane.b32.xlu0 %v1670, 126
        %v1888 = vpop.permute.xlu0 %1887
        %1889 = vrot.lane.b32.xlu0 %v1671, 126
        %v1890 = vpop.permute.xlu0 %1889
        %1891 = vrot.lane.b32.xlu0 %v1672, 126
        %v1892 = vpop.permute.xlu0 %1891
        %1893 = vrot.lane.b32.xlu0 %v1673, 126
        %v1894 = vpop.permute.xlu0 %1893
        %1895 = vrot.lane.b32.xlu0 %v1674, 126
        %v1896 = vpop.permute.xlu0 %1895
        %1897 = vrot.lane.b32.xlu0 %v1675, 126
        %v1898 = vpop.permute.xlu0 %1897
        %1899 = vrot.lane.b32.xlu0 %v1676, 126
        %v1900 = vpop.permute.xlu0 %1899
        %vm1901 = vcmask 1031168
        %v1902 = vsel %vm1901, %v1870, %v1872
        %v1903 = vsel %vm1901, %v1874, %v1876
        %v1904 = vsel %vm1901, %v1878, %v1880
        %v1905 = vsel %vm1901, %v1882, %v1884
        %v1906 = vsel %vm1901, %v1886, %v1888
        %v1907 = vsel %vm1901, %v1890, %v1892
        %v1908 = vsel %vm1901, %v1894, %v1896
        %v1909 = vsel %vm1901, %v1898, %v1900
        %v1926 = vadd.f32 %v1572, %v1902
        %v1927 = vadd.f32 %v1573, %v1872
        %v1928 = vadd.f32 %v1574, %v1903
        %v1929 = vadd.f32 %v1575, %v1876
        %v1930 = vadd.f32 %v1576, %v1904
        %v1931 = vadd.f32 %v1577, %v1880
        %v1932 = vadd.f32 %v1578, %v1905
        %v1933 = vadd.f32 %v1579, %v1884
        %v1934 = vadd.f32 %v1580, %v1906
        %v1935 = vadd.f32 %v1581, %v1888
        %v1936 = vadd.f32 %v1582, %v1907
        %v1937 = vadd.f32 %v1583, %v1892
        %v1938 = vadd.f32 %v1584, %v1908
        %v1939 = vadd.f32 %v1585, %v1896
        %v1940 = vadd.f32 %v1586, %v1909
        %v1941 = vadd.f32 %v1587, %v1900
        %1958 = vrot.lane.b32.xlu0 %v1837, 113
        %v1959 = vpop.permute.xlu0 %1958
        %1960 = vrot.lane.b32.xlu0 %v1838, 113
        %v1961 = vpop.permute.xlu0 %1960
        %1962 = vrot.lane.b32.xlu0 %v1839, 113
        %v1963 = vpop.permute.xlu0 %1962
        %1964 = vrot.lane.b32.xlu0 %v1840, 113
        %v1965 = vpop.permute.xlu0 %1964
        %1966 = vrot.lane.b32.xlu0 %v1841, 113
        %v1967 = vpop.permute.xlu0 %1966
        %1968 = vrot.lane.b32.xlu0 %v1842, 113
        %v1969 = vpop.permute.xlu0 %1968
        %1970 = vrot.lane.b32.xlu0 %v1843, 113
        %v1971 = vpop.permute.xlu0 %1970
        %1972 = vrot.lane.b32.xlu0 %v1844, 113
        %v1973 = vpop.permute.xlu0 %1972
        %1974 = vrot.lane.b32.xlu0 %v1845, 113
        %v1975 = vpop.permute.xlu0 %1974
        %1976 = vrot.lane.b32.xlu0 %v1846, 113
        %v1977 = vpop.permute.xlu0 %1976
        %1978 = vrot.lane.b32.xlu0 %v1847, 113
        %v1979 = vpop.permute.xlu0 %1978
        %1980 = vrot.lane.b32.xlu0 %v1848, 113
        %v1981 = vpop.permute.xlu0 %1980
        %1982 = vrot.lane.b32.xlu0 %v1849, 113
        %v1983 = vpop.permute.xlu0 %1982
        %1984 = vrot.lane.b32.xlu0 %v1850, 113
        %v1985 = vpop.permute.xlu0 %1984
        %1986 = vrot.lane.b32.xlu0 %v1851, 113
        %v1987 = vpop.permute.xlu0 %1986
        %1988 = vrot.lane.b32.xlu0 %v1852, 113
        %v1989 = vpop.permute.xlu0 %1988
        %vm1990 = vcmask 924672
        %v1991 = vsel %vm1990, %v1959, %v1961
        %v1992 = vsel %vm1990, %v1963, %v1965
        %v1993 = vsel %vm1990, %v1967, %v1969
        %v1994 = vsel %vm1990, %v1971, %v1973
        %v1995 = vsel %vm1990, %v1975, %v1977
        %v1996 = vsel %vm1990, %v1979, %v1981
        %v1997 = vsel %vm1990, %v1983, %v1985
        %v1998 = vsel %vm1990, %v1987, %v1989
        %v2015 = vadd.f32 %v1749, %v1991
        %v2016 = vadd.f32 %v1750, %v1961
        %v2017 = vadd.f32 %v1751, %v1992
        %v2018 = vadd.f32 %v1752, %v1965
        %v2019 = vadd.f32 %v1753, %v1993
        %v2020 = vadd.f32 %v1754, %v1969
        %v2021 = vadd.f32 %v1755, %v1994
        %v2022 = vadd.f32 %v1756, %v1973
        %v2023 = vadd.f32 %v1757, %v1995
        %v2024 = vadd.f32 %v1758, %v1977
        %v2025 = vadd.f32 %v1759, %v1996
        %v2026 = vadd.f32 %v1760, %v1981
        %v2027 = vadd.f32 %v1761, %v1997
        %v2028 = vadd.f32 %v1762, %v1985
        %v2029 = vadd.f32 %v1763, %v1998
        %v2030 = vadd.f32 %v1764, %v1989
        %2047 = vrot.lane.b32.xlu0 %v2015, 111
        %v2048 = vpop.permute.xlu0 %2047
        %2049 = vrot.lane.b32.xlu0 %v2016, 111
        %v2050 = vpop.permute.xlu0 %2049
        %2051 = vrot.lane.b32.xlu0 %v2017, 111
        %v2052 = vpop.permute.xlu0 %2051
        %2053 = vrot.lane.b32.xlu0 %v2018, 111
        %v2054 = vpop.permute.xlu0 %2053
        %2055 = vrot.lane.b32.xlu0 %v2019, 111
        %v2056 = vpop.permute.xlu0 %2055
        %2057 = vrot.lane.b32.xlu0 %v2020, 111
        %v2058 = vpop.permute.xlu0 %2057
        %2059 = vrot.lane.b32.xlu0 %v2021, 111
        %v2060 = vpop.permute.xlu0 %2059
        %2061 = vrot.lane.b32.xlu0 %v2022, 111
        %v2062 = vpop.permute.xlu0 %2061
        %2063 = vrot.lane.b32.xlu0 %v2023, 111
        %v2064 = vpop.permute.xlu0 %2063
        %2065 = vrot.lane.b32.xlu0 %v2024, 111
        %v2066 = vpop.permute.xlu0 %2065
        %2067 = vrot.lane.b32.xlu0 %v2025, 111
        %v2068 = vpop.permute.xlu0 %2067
        %2069 = vrot.lane.b32.xlu0 %v2026, 111
        %v2070 = vpop.permute.xlu0 %2069
        %2071 = vrot.lane.b32.xlu0 %v2027, 111
        %v2072 = vpop.permute.xlu0 %2071
        %2073 = vrot.lane.b32.xlu0 %v2028, 111
        %v2074 = vpop.permute.xlu0 %2073
        %2075 = vrot.lane.b32.xlu0 %v2029, 111
        %v2076 = vpop.permute.xlu0 %2075
        %2077 = vrot.lane.b32.xlu0 %v2030, 111
        %v2078 = vpop.permute.xlu0 %2077
        %vm2079 = vcmask 908288
        %v2080 = vsel %vm2079, %v2048, %v2050
        %v2081 = vsel %vm2079, %v2052, %v2054
        %v2082 = vsel %vm2079, %v2056, %v2058
        %v2083 = vsel %vm2079, %v2060, %v2062
        %v2084 = vsel %vm2079, %v2064, %v2066
        %v2085 = vsel %vm2079, %v2068, %v2070
        %v2086 = vsel %vm2079, %v2072, %v2074
        %v2087 = vsel %vm2079, %v2076, %v2078
        %v2104 = vadd.f32 %v1926, %v2080
        %v2105 = vadd.f32 %v1927, %v2050
        %v2106 = vadd.f32 %v1928, %v2081
        %v2107 = vadd.f32 %v1929, %v2054
        %v2108 = vadd.f32 %v1930, %v2082
        %v2109 = vadd.f32 %v1931, %v2058
        %v2110 = vadd.f32 %v1932, %v2083
        %v2111 = vadd.f32 %v1933, %v2062
        %v2112 = vadd.f32 %v1934, %v2084
        %v2113 = vadd.f32 %v1935, %v2066
        %v2114 = vadd.f32 %v1936, %v2085
        %v2115 = vadd.f32 %v1937, %v2070
        %v2116 = vadd.f32 %v1938, %v2086
        %v2117 = vadd.f32 %v1939, %v2074
        %v2118 = vadd.f32 %v1940, %v2087
        %v2119 = vadd.f32 %v1941, %v2078
        %2136 = vrot.lane.b32.xlu0 %v1483, 94
        %v2137 = vpop.permute.xlu0 %2136
        %2138 = vrot.lane.b32.xlu0 %v1484, 94
        %v2139 = vpop.permute.xlu0 %2138
        %2140 = vrot.lane.b32.xlu0 %v1485, 94
        %v2141 = vpop.permute.xlu0 %2140
        %2142 = vrot.lane.b32.xlu0 %v1486, 94
        %v2143 = vpop.permute.xlu0 %2142
        %2144 = vrot.lane.b32.xlu0 %v1487, 94
        %v2145 = vpop.permute.xlu0 %2144
        %2146 = vrot.lane.b32.xlu0 %v1488, 94
        %v2147 = vpop.permute.xlu0 %2146
        %2148 = vrot.lane.b32.xlu0 %v1489, 94
        %v2149 = vpop.permute.xlu0 %2148
        %2150 = vrot.lane.b32.xlu0 %v1490, 94
        %v2151 = vpop.permute.xlu0 %2150
        %2152 = vrot.lane.b32.xlu0 %v1491, 94
        %v2153 = vpop.permute.xlu0 %2152
        %2154 = vrot.lane.b32.xlu0 %v1492, 94
        %v2155 = vpop.permute.xlu0 %2154
        %2156 = vrot.lane.b32.xlu0 %v1493, 94
        %v2157 = vpop.permute.xlu0 %2156
        %2158 = vrot.lane.b32.xlu0 %v1494, 94
        %v2159 = vpop.permute.xlu0 %2158
        %2160 = vrot.lane.b32.xlu0 %v1495, 94
        %v2161 = vpop.permute.xlu0 %2160
        %2162 = vrot.lane.b32.xlu0 %v1496, 94
        %v2163 = vpop.permute.xlu0 %2162
        %2164 = vrot.lane.b32.xlu0 %v1497, 94
        %v2165 = vpop.permute.xlu0 %2164
        %2166 = vrot.lane.b32.xlu0 %v1498, 94
        %v2167 = vpop.permute.xlu0 %2166
        %vm2168 = vcmask 769024
        %v2169 = vsel %vm2168, %v2137, %v2139
        %v2170 = vsel %vm2168, %v2141, %v2143
        %v2171 = vsel %vm2168, %v2145, %v2147
        %v2172 = vsel %vm2168, %v2149, %v2151
        %v2173 = vsel %vm2168, %v2153, %v2155
        %v2174 = vsel %vm2168, %v2157, %v2159
        %v2175 = vsel %vm2168, %v2161, %v2163
        %v2176 = vsel %vm2168, %v2165, %v2167
        %v2193 = vadd.f32 %v2104, %v2169
        %v2194 = vadd.f32 %v2105, %v2139
        %v2195 = vadd.f32 %v2106, %v2170
        %v2196 = vadd.f32 %v2107, %v2143
        %v2197 = vadd.f32 %v2108, %v2171
        %v2198 = vadd.f32 %v2109, %v2147
        %v2199 = vadd.f32 %v2110, %v2172
        %v2200 = vadd.f32 %v2111, %v2151
        %v2201 = vadd.f32 %v2112, %v2173
        %v2202 = vadd.f32 %v2113, %v2155
        %v2203 = vadd.f32 %v2114, %v2174
        %v2204 = vadd.f32 %v2115, %v2159
        %v2205 = vadd.f32 %v2116, %v2175
        %v2206 = vadd.f32 %v2117, %v2163
        %v2207 = vadd.f32 %v2118, %v2176
        %v2208 = vadd.f32 %v2119, %v2167
        %v2209 = vld [vmem:[%s5] sm:$0xff]
        %v2210 = vld [vmem:[%s5 + $0x8] sm:$0xff]
        %v2211 = vld [vmem:[%s5 + $0x10] sm:$0xff]
        %v2212 = vld [vmem:[%s5 + $0x18] sm:$0xff]
        %v2213 = vld [vmem:[%s5 + $0x20] sm:$0xff]
        %v2214 = vld [vmem:[%s5 + $0x28] sm:$0xff]
        %v2215 = vld [vmem:[%s5 + $0x30] sm:$0xff]
        %v2216 = vld [vmem:[%s5 + $0x38] sm:$0xff]
        %2218 = vset.pattern.permute.xlu0 0
        %2219 = vperm.xlu0 %2218, %v2209
        %v2220 = vpop.permute.xlu0 %2219
        %2223 = vset.pattern.permute.xlu0 0
        %2224 = vperm.xlu0 %2223, %v2210
        %v2225 = vpop.permute.xlu0 %2224
        %2228 = vset.pattern.permute.xlu0 0
        %2229 = vperm.xlu0 %2228, %v2211
        %v2230 = vpop.permute.xlu0 %2229
        %2233 = vset.pattern.permute.xlu0 0
        %2234 = vperm.xlu0 %2233, %v2212
        %v2235 = vpop.permute.xlu0 %2234
        %2238 = vset.pattern.permute.xlu0 0
        %2239 = vperm.xlu0 %2238, %v2213
        %v2240 = vpop.permute.xlu0 %2239
        %2243 = vset.pattern.permute.xlu0 0
        %2244 = vperm.xlu0 %2243, %v2214
        %v2245 = vpop.permute.xlu0 %2244
        %2248 = vset.pattern.permute.xlu0 0
        %2249 = vperm.xlu0 %2248, %v2215
        %v2250 = vpop.permute.xlu0 %2249
        %2253 = vset.pattern.permute.xlu0 0
        %2254 = vperm.xlu0 %2253, %v2216
        %v2255 = vpop.permute.xlu0 %2254
        %v2257 = vadd.f32 %v2193, %v2220
        %v2258 = vadd.f32 %v2194, %v2220
        %v2259 = vadd.f32 %v2195, %v2225
        %v2260 = vadd.f32 %v2196, %v2225
        %v2261 = vadd.f32 %v2197, %v2230
        %v2262 = vadd.f32 %v2198, %v2230
        %v2263 = vadd.f32 %v2199, %v2235
        %v2264 = vadd.f32 %v2200, %v2235
        %v2265 = vadd.f32 %v2201, %v2240
        %v2266 = vadd.f32 %v2202, %v2240
        %v2267 = vadd.f32 %v2203, %v2245
        %v2268 = vadd.f32 %v2204, %v2245
        %v2269 = vadd.f32 %v2205, %v2250
        %v2270 = vadd.f32 %v2206, %v2250
        %v2271 = vadd.f32 %v2207, %v2255
        %v2272 = vadd.f32 %v2208, %v2255
        %v2273 = vmax.f32 %v2257, 0.0
        %v2274 = vmax.f32 %v2258, 0.0
        %v2275 = vmax.f32 %v2259, 0.0
        %v2276 = vmax.f32 %v2260, 0.0
        %v2277 = vmax.f32 %v2261, 0.0
        %v2278 = vmax.f32 %v2262, 0.0
        %v2279 = vmax.f32 %v2263, 0.0
        %v2280 = vmax.f32 %v2264, 0.0
        %v2281 = vmax.f32 %v2265, 0.0
        %v2282 = vmax.f32 %v2266, 0.0
        %v2283 = vmax.f32 %v2267, 0.0
        %v2284 = vmax.f32 %v2268, 0.0
        %v2285 = vmax.f32 %v2269, 0.0
        %v2286 = vmax.f32 %v2270, 0.0
        %v2287 = vmax.f32 %v2271, 0.0
        %v2288 = vmax.f32 %v2272, 0.0
        %v2289 = vstv %s504
        %v2290 = vmul.f32 %v550, %v2289
        %v2291 = vsub.f32 1.0, %v2290
        %v2292 = vstv %s506
        %v2293 = vmul.f32 %v550, %v2292
        %v2295 = vrot.slane %v2293, 5
        %v2296 = vrot.slane %v2295, 4
        %v2298 = vsub.f32 %v2291, %v2296
        %v2300 = vlaneseq
        %v2301 = vshrl.u32 %v2300, 7
        %v2302 = vsub.s32 2, %v2301
        %v2303 = vrot.slane %v2298, %v2302
        %v2304 = vlaneseq
        %v2305 = vshrl.u32 %v2304, 7
        %v2306 = vsub.s32 6, %v2305
        %v2307 = vrot.slane %v2298, %v2306
        %v2310 = vlaneseq
        %v2311 = vshrl.u32 %v2310, 7
        %v2312 = vsub.s32 2, %v2311
        %v2313 = vrot.slane %v2303, %v2312
        %v2314 = vlaneseq
        %v2315 = vshrl.u32 %v2314, 7
        %v2316 = vsub.s32 2, %v2315
        %v2317 = vrot.slane %v2307, %v2316
        %2320 = vrot.lane.b32.xlu0 %v2313, 15
        %v2321 = vpop.permute.xlu0 %2320
        %2322 = vrot.lane.b32.xlu0 %v2317, 15
        %v2323 = vpop.permute.xlu0 %2322
        %v2324 = vsel %vm1339, %v2321, %v2323
        %v2327 = vmul.f32 %v2273, %v2321
        %v2328 = vmul.f32 %v2274, %v2324
        %v2329 = vmul.f32 %v2275, %v2321
        %v2330 = vmul.f32 %v2276, %v2324
        %v2331 = vmul.f32 %v2277, %v2321
        %v2332 = vmul.f32 %v2278, %v2324
        %v2333 = vmul.f32 %v2279, %v2321
        %v2334 = vmul.f32 %v2280, %v2324
        %v2335 = vmul.f32 %v2281, %v2321
        %v2336 = vmul.f32 %v2282, %v2324
        %v2337 = vmul.f32 %v2283, %v2321
        %v2338 = vmul.f32 %v2284, %v2324
        %v2339 = vmul.f32 %v2285, %v2321
        %v2340 = vmul.f32 %v2286, %v2324
        %v2341 = vmul.f32 %v2287, %v2321
        %v2342 = vmul.f32 %v2288, %v2324
        %v2343 = vpack.c.bf16 %v2329, %v2327
        %v2344 = vpack.c.bf16 %v2330, %v2328
        %v2345 = vpack.c.bf16 %v2333, %v2331
        %v2346 = vpack.c.bf16 %v2334, %v2332
        %v2347 = vpack.c.bf16 %v2337, %v2335
        %v2348 = vpack.c.bf16 %v2338, %v2336
        %v2349 = vpack.c.bf16 %v2341, %v2339
        %v2350 = vpack.c.bf16 %v2342, %v2340
        %v2351 = vld [vmem:[%s6] sm:$0xf]
        %v2352 = vld [vmem:[%s6 + $0x4] sm:$0xf]
        %v2353 = vld [vmem:[%s6 + $0x8] sm:$0xf]
        %v2354 = vld [vmem:[%s6 + $0xc] sm:$0xf]
        %v2355 = vld [vmem:[%s6 + $0x10] sm:$0xf]
        %v2356 = vld [vmem:[%s6 + $0x14] sm:$0xf]
        %v2357 = vld [vmem:[%s6 + $0x18] sm:$0xf]
        %v2358 = vld [vmem:[%s6 + $0x1c] sm:$0xf]
        %v2359 = vld [vmem:[%s6 + $0x20] sm:$0xf]
        %v2360 = vld [vmem:[%s6 + $0x24] sm:$0xf]
        %v2361 = vld [vmem:[%s6 + $0x28] sm:$0xf]
        %v2362 = vld [vmem:[%s6 + $0x2c] sm:$0xf]
        %v2363 = vld [vmem:[%s6 + $0x30] sm:$0xf]
        %v2364 = vld [vmem:[%s6 + $0x34] sm:$0xf]
        %v2365 = vld [vmem:[%s6 + $0x38] sm:$0xf]
        %v2366 = vld [vmem:[%s6 + $0x3c] sm:$0xf]
        %v2367 = vld [vmem:[%s6 + $0x40] sm:$0xf]
        %v2368 = vld [vmem:[%s6 + $0x44] sm:$0xf]
        %v2387 = vunpack.c.l.b16 %v2351
        %v2388 = vunpack.c.l.b16 %v2352
        %v2389 = vunpack.c.l.b16 %v2353
        %v2390 = vunpack.c.l.b16 %v2354
        %v2391 = vunpack.c.l.b16 %v2355
        %v2392 = vunpack.c.l.b16 %v2356
        %v2393 = vunpack.c.l.b16 %v2357
        %v2394 = vunpack.c.l.b16 %v2358
        %v2395 = vunpack.c.l.b16 %v2359
        %v2396 = vunpack.c.l.b16 %v2360
        %v2397 = vunpack.c.l.b16 %v2361
        %v2398 = vunpack.c.l.b16 %v2362
        %v2399 = vunpack.c.l.b16 %v2363
        %v2400 = vunpack.c.l.b16 %v2364
        %v2401 = vunpack.c.l.b16 %v2365
        %v2402 = vunpack.c.l.b16 %v2366
        %v2403 = vunpack.c.l.b16 %v2367
        %v2404 = vunpack.c.l.b16 %v2368
        %v2405 = vpack.c.b16 %v2388, %v2387
        %v2406 = vpack.c.b16 %v2390, %v2389
        %v2407 = vpack.c.b16 %v2392, %v2391
        %v2408 = vpack.c.b16 %v2394, %v2393
        %v2409 = vpack.c.b16 %v2396, %v2395
        %v2410 = vpack.c.b16 %v2398, %v2397
        %v2411 = vpack.c.b16 %v2400, %v2399
        %v2412 = vpack.c.b16 %v2402, %v2401
        %v2413 = vpack.c.b16 %v2404, %v2403
        %2422 = vrot.lane.b32.xlu0 %v2343, 113
        %v2423 = vpop.permute.xlu0 %2422
        %2424 = vrot.lane.b32.xlu0 %v2344, 113
        %v2425 = vpop.permute.xlu0 %2424
        %2426 = vrot.lane.b32.xlu0 %v2345, 113
        %v2427 = vpop.permute.xlu0 %2426
        %2428 = vrot.lane.b32.xlu0 %v2346, 113
        %v2429 = vpop.permute.xlu0 %2428
        %2430 = vrot.lane.b32.xlu0 %v2347, 113
        %v2431 = vpop.permute.xlu0 %2430
        %2432 = vrot.lane.b32.xlu0 %v2348, 113
        %v2433 = vpop.permute.xlu0 %2432
        %2434 = vrot.lane.b32.xlu0 %v2349, 113
        %v2435 = vpop.permute.xlu0 %2434
        %2436 = vrot.lane.b32.xlu0 %v2350, 113
        %v2437 = vpop.permute.xlu0 %2436
        %vm2438 = vcmask 924672
        %v2439 = vsel %vm2438, %v2423, %v2425
        %v2440 = vsel %vm2438, %v2427, %v2429
        %v2441 = vsel %vm2438, %v2431, %v2433
        %v2442 = vsel %vm2438, %v2435, %v2437
        %v2452 = vsel %vm542, %v2405, 0
        %v2455 = vsel %vm542, %v2406, 0
        %v2458 = vsel %vm542, %v2407, 0
        %v2461 = vsel %vm542, %v2408, 0
        %v2464 = vsel %vm542, %v2409, 0
        %v2467 = vsel %vm542, %v2410, 0
        %v2470 = vsel %vm542, %v2411, 0
        %v2473 = vsel %vm542, %v2412, 0
        %v2476 = vsel %vm542, %v2413, 0
        %2478 = vmatprep.subr.bf16.mxu0 %v2425
        %2479 = vmatpush1.bf16.msra.mxu0 %v2439
        %2480 = vmatprep.subr.bf16.mxu0 %v2429
        %2481 = vmatpush1.bf16.msra.mxu0 %v2440
        %2482 = vmatprep.subr.bf16.mxu0 %v2433
        %2483 = vmatpush1.bf16.msra.mxu0 %v2441
        %2484 = vmatprep.subr.bf16.mxu0 %v2437
        %2485 = vmatpush1.bf16.msra.mxu0 %v2442
        %2486 = vmatprep.subr.bf16.mxu0 0
        %2487 = vmatpush1.bf16.msra.mxu0 0
        %2488 = vmatprep.subr.bf16.mxu0 0
        %2489 = vmatpush1.bf16.msra.mxu0 0
        %2490 = vmatprep.subr.bf16.mxu0 0
        %2491 = vmatpush1.bf16.msra.mxu0 0
        %2492 = vmatprep.subr.bf16.mxu0 0
        %2493 = vmatpush1.bf16.msra.mxu0 0
        %2494 = vmatprep.subr.bf16.mxu0 0
        %2495 = vmatpush1.bf16.msra.mxu0 0
        %2496 = vmatprep.subr.bf16.mxu0 0
        %2497 = vmatpush1.bf16.msra.mxu0 0
        %2498 = vmatprep.subr.bf16.mxu0 0
        %2499 = vmatpush1.bf16.msra.mxu0 0
        %2500 = vmatprep.subr.bf16.mxu0 0
        %2501 = vmatpush1.bf16.msra.mxu0 0
        %2502 = vmatprep.subr.bf16.mxu0 0
        %2503 = vmatpush1.bf16.msra.mxu0 0
        %2504 = vmatprep.subr.bf16.mxu0 0
        %2505 = vmatpush1.bf16.msra.mxu0 0
        %2506 = vmatprep.subr.bf16.mxu0 0
        %2507 = vmatpush1.bf16.msra.mxu0 0
        %2508 = vmatprep.subr.bf16.mxu0 0
        %2509 = vmatpush1.bf16.msra.mxu0 0
        %2510 = vmatprep.mubr.bf16.mxu0 0
        %2511 = vmatmul.mubr.bf16.gmra.mrb[0].mxu0 %v2452
        %v2512 = vpop.f32.mrb[0].mxu0
        %v2513 = vadd.f32 0.0, %v2512
        %v2514 = vpop.f32.mrb[0].mxu0
        %v2515 = vadd.f32 0.0, %v2514
        %v2516 = vpop.f32.mrb[0].mxu0
        %v2517 = vadd.f32 0.0, %v2516
        %v2518 = vpop.f32.mrb[0].mxu0
        %v2519 = vadd.f32 0.0, %v2518
        %2520 = vmatprep.mubr.bf16.mxu0 0
        %2521 = vmatmul.mubr.bf16.gmra.mrb[0].mxu0 %v2455
        %v2522 = vpop.f32.mrb[0].mxu0
        %v2523 = vadd.f32 0.0, %v2522
        %v2524 = vpop.f32.mrb[0].mxu0
        %v2525 = vadd.f32 0.0, %v2524
        %v2526 = vpop.f32.mrb[0].mxu0
        %v2527 = vadd.f32 0.0, %v2526
        %v2528 = vpop.f32.mrb[0].mxu0
        %v2529 = vadd.f32 0.0, %v2528
        %2530 = vmatprep.mubr.bf16.mxu0 0
        %2531 = vmatmul.mubr.bf16.gmra.mrb[0].mxu0 %v2458
        %v2532 = vpop.f32.mrb[0].mxu0
        %v2533 = vadd.f32 0.0, %v2532
        %v2534 = vpop.f32.mrb[0].mxu0
        %v2535 = vadd.f32 0.0, %v2534
        %v2536 = vpop.f32.mrb[0].mxu0
        %v2537 = vadd.f32 0.0, %v2536
        %v2538 = vpop.f32.mrb[0].mxu0
        %v2539 = vadd.f32 0.0, %v2538
        %2540 = vmatprep.mubr.bf16.mxu0 0
        %2541 = vmatmul.mubr.bf16.gmra.mrb[0].mxu0 %v2461
        %v2542 = vpop.f32.mrb[0].mxu0
        %v2543 = vadd.f32 0.0, %v2542
        %v2544 = vpop.f32.mrb[0].mxu0
        %v2545 = vadd.f32 0.0, %v2544
        %v2546 = vpop.f32.mrb[0].mxu0
        %v2547 = vadd.f32 0.0, %v2546
        %v2548 = vpop.f32.mrb[0].mxu0
        %v2549 = vadd.f32 0.0, %v2548
        %2550 = vmatprep.mubr.bf16.mxu0 0
        %2551 = vmatmul.mubr.bf16.gmra.mrb[0].mxu0 %v2464
        %v2552 = vpop.f32.mrb[0].mxu0
        %v2553 = vadd.f32 0.0, %v2552
        %v2554 = vpop.f32.mrb[0].mxu0
        %v2555 = vadd.f32 0.0, %v2554
        %v2556 = vpop.f32.mrb[0].mxu0
        %v2557 = vadd.f32 0.0, %v2556
        %v2558 = vpop.f32.mrb[0].mxu0
        %v2559 = vadd.f32 0.0, %v2558
        %2560 = vmatprep.mubr.bf16.mxu0 0
        %2561 = vmatmul.mubr.bf16.gmra.mrb[0].mxu0 %v2467
        %v2562 = vpop.f32.mrb[0].mxu0
        %v2563 = vadd.f32 0.0, %v2562
        %v2564 = vpop.f32.mrb[0].mxu0
        %v2565 = vadd.f32 0.0, %v2564
        %v2566 = vpop.f32.mrb[0].mxu0
        %v2567 = vadd.f32 0.0, %v2566
        %v2568 = vpop.f32.mrb[0].mxu0
        %v2569 = vadd.f32 0.0, %v2568
        %2570 = vmatprep.mubr.bf16.mxu0 0
        %2571 = vmatmul.mubr.bf16.gmra.mrb[0].mxu0 %v2470
        %v2572 = vpop.f32.mrb[0].mxu0
        %v2573 = vadd.f32 0.0, %v2572
        %v2574 = vpop.f32.mrb[0].mxu0
        %v2575 = vadd.f32 0.0, %v2574
        %v2576 = vpop.f32.mrb[0].mxu0
        %v2577 = vadd.f32 0.0, %v2576
        %v2578 = vpop.f32.mrb[0].mxu0
        %v2579 = vadd.f32 0.0, %v2578
        %2580 = vmatprep.mubr.bf16.mxu0 0
        %2581 = vmatmul.mubr.bf16.gmra.mrb[0].mxu0 %v2473
        %v2582 = vpop.f32.mrb[0].mxu0
        %v2583 = vadd.f32 0.0, %v2582
        %v2584 = vpop.f32.mrb[0].mxu0
        %v2585 = vadd.f32 0.0, %v2584
        %v2586 = vpop.f32.mrb[0].mxu0
        %v2587 = vadd.f32 0.0, %v2586
        %v2588 = vpop.f32.mrb[0].mxu0
        %v2589 = vadd.f32 0.0, %v2588
        %2590 = vmatprep.mubr.bf16.mxu0 0
        %2591 = vmatmul.mubr.bf16.gmra.mrb[0].mxu0 %v2476
        %v2592 = vpop.f32.mrb[0].mxu0
        %v2593 = vadd.f32 0.0, %v2592
        %v2594 = vpop.f32.mrb[0].mxu0
        %v2595 = vadd.f32 0.0, %v2594
        %v2596 = vpop.f32.mrb[0].mxu0
        %v2597 = vadd.f32 0.0, %v2596
        %v2598 = vpop.f32.mrb[0].mxu0
        %v2599 = vadd.f32 0.0, %v2598
        %2600 = vdwg.mxu0
        %v2601 = vlaneseq
        %v2602 = vshrl.u32 %v2601, 7
        %v2603 = vsub.s32 0, %v2602
        %v2604 = vrot.slane %v550, %v2603
        %2606 = vrot.lane.b32.xlu0 %v2604, 15
        %v2607 = vpop.permute.xlu0 %2606
        %v2609 = vmul.f32 %v2513, %v2607
        %v2610 = vmul.f32 %v2515, %v2607
        %v2611 = vmul.f32 %v2517, %v2607
        %v2612 = vmul.f32 %v2519, %v2607
        %v2613 = vlaneseq
        %v2614 = vshrl.u32 %v2613, 7
        %v2615 = vsub.s32 1, %v2614
        %v2616 = vrot.slane %v550, %v2615
        %2618 = vrot.lane.b32.xlu0 %v2616, 17
        %v2619 = vpop.permute.xlu0 %2618
        %v2621 = vmul.f32 %v2533, %v2619
        %v2622 = vmul.f32 %v2535, %v2619
        %v2623 = vmul.f32 %v2537, %v2619
        %v2624 = vmul.f32 %v2539, %v2619
        %2625 = vrot.lane.b32.xlu0 %v2604, 31
        %v2626 = vpop.permute.xlu0 %2625
        %v2628 = vmul.f32 %v2543, %v2626
        %v2629 = vmul.f32 %v2545, %v2626
        %v2630 = vmul.f32 %v2547, %v2626
        %v2631 = vmul.f32 %v2549, %v2626
        %2632 = vrot.lane.b32.xlu0 %v2616, 33
        %v2633 = vpop.permute.xlu0 %2632
        %v2635 = vmul.f32 %v2563, %v2633
        %v2636 = vmul.f32 %v2565, %v2633
        %v2637 = vmul.f32 %v2567, %v2633
        %v2638 = vmul.f32 %v2569, %v2633
        %2639 = vrot.lane.b32.xlu0 %v2604, 47
        %v2640 = vpop.permute.xlu0 %2639
        %v2642 = vmul.f32 %v2573, %v2640
        %v2643 = vmul.f32 %v2575, %v2640
        %v2644 = vmul.f32 %v2577, %v2640
        %v2645 = vmul.f32 %v2579, %v2640
        %2646 = vrot.lane.b32.xlu0 %v2616, 49
        %v2647 = vpop.permute.xlu0 %2646
        %v2649 = vmul.f32 %v2593, %v2647
        %v2650 = vmul.f32 %v2595, %v2647
        %v2651 = vmul.f32 %v2597, %v2647
        %v2652 = vmul.f32 %v2599, %v2647
        %2657 = vrot.lane.b32.xlu0 %v2523, 127
        %v2658 = vpop.permute.xlu0 %2657
        %2659 = vrot.lane.b32.xlu0 %v2525, 127
        %v2660 = vpop.permute.xlu0 %2659
        %2661 = vrot.lane.b32.xlu0 %v2527, 127
        %v2662 = vpop.permute.xlu0 %2661
        %2663 = vrot.lane.b32.xlu0 %v2529, 127
        %v2664 = vpop.permute.xlu0 %2663
        %v2665 = vsel %vm1547, %v2658, %v2660
        %v2666 = vsel %vm1547, %v2662, %v2664
        %v2671 = vadd.f32 %v2609, %v2665
        %v2672 = vadd.f32 %v2610, %v2660
        %v2673 = vadd.f32 %v2611, %v2666
        %v2674 = vadd.f32 %v2612, %v2664
        %2679 = vrot.lane.b32.xlu0 %v2628, 114
        %v2680 = vpop.permute.xlu0 %2679
        %2681 = vrot.lane.b32.xlu0 %v2629, 114
        %v2682 = vpop.permute.xlu0 %2681
        %2683 = vrot.lane.b32.xlu0 %v2630, 114
        %v2684 = vpop.permute.xlu0 %2683
        %2685 = vrot.lane.b32.xlu0 %v2631, 114
        %v2686 = vpop.permute.xlu0 %2685
        %v2687 = vsel %vm1636, %v2680, %v2682
        %v2688 = vsel %vm1636, %v2684, %v2686
        %v2693 = vadd.f32 %v2621, %v2687
        %v2694 = vadd.f32 %v2622, %v2682
        %v2695 = vadd.f32 %v2623, %v2688
        %v2696 = vadd.f32 %v2624, %v2686
        %2701 = vrot.lane.b32.xlu0 %v2635, 127
        %v2702 = vpop.permute.xlu0 %2701
        %2703 = vrot.lane.b32.xlu0 %v2636, 127
        %v2704 = vpop.permute.xlu0 %2703
        %2705 = vrot.lane.b32.xlu0 %v2637, 127
        %v2706 = vpop.permute.xlu0 %2705
        %2707 = vrot.lane.b32.xlu0 %v2638, 127
        %v2708 = vpop.permute.xlu0 %2707
        %v2709 = vsel %vm1547, %v2702, %v2704
        %v2710 = vsel %vm1547, %v2706, %v2708
        %v2715 = vadd.f32 %v2553, %v2709
        %v2716 = vadd.f32 %v2555, %v2704
        %v2717 = vadd.f32 %v2557, %v2710
        %v2718 = vadd.f32 %v2559, %v2708
        %2723 = vrot.lane.b32.xlu0 %v2583, 127
        %v2724 = vpop.permute.xlu0 %2723
        %2725 = vrot.lane.b32.xlu0 %v2585, 127
        %v2726 = vpop.permute.xlu0 %2725
        %2727 = vrot.lane.b32.xlu0 %v2587, 127
        %v2728 = vpop.permute.xlu0 %2727
        %2729 = vrot.lane.b32.xlu0 %v2589, 127
        %v2730 = vpop.permute.xlu0 %2729
        %v2731 = vsel %vm1547, %v2724, %v2726
        %v2732 = vsel %vm1547, %v2728, %v2730
        %v2737 = vadd.f32 %v2642, %v2731
        %v2738 = vadd.f32 %v2643, %v2726
        %v2739 = vadd.f32 %v2644, %v2732
        %v2740 = vadd.f32 %v2645, %v2730
        %2745 = vrot.lane.b32.xlu0 %v2693, 126
        %v2746 = vpop.permute.xlu0 %2745
        %2747 = vrot.lane.b32.xlu0 %v2694, 126
        %v2748 = vpop.permute.xlu0 %2747
        %2749 = vrot.lane.b32.xlu0 %v2695, 126
        %v2750 = vpop.permute.xlu0 %2749
        %2751 = vrot.lane.b32.xlu0 %v2696, 126
        %v2752 = vpop.permute.xlu0 %2751
        %v2753 = vsel %vm1901, %v2746, %v2748
        %v2754 = vsel %vm1901, %v2750, %v2752
        %v2759 = vadd.f32 %v2671, %v2753
        %v2760 = vadd.f32 %v2672, %v2748
        %v2761 = vadd.f32 %v2673, %v2754
        %v2762 = vadd.f32 %v2674, %v2752
        %2767 = vrot.lane.b32.xlu0 %v2737, 113
        %v2768 = vpop.permute.xlu0 %2767
        %2769 = vrot.lane.b32.xlu0 %v2738, 113
        %v2770 = vpop.permute.xlu0 %2769
        %2771 = vrot.lane.b32.xlu0 %v2739, 113
        %v2772 = vpop.permute.xlu0 %2771
        %2773 = vrot.lane.b32.xlu0 %v2740, 113
        %v2774 = vpop.permute.xlu0 %2773
        %v2775 = vsel %vm1990, %v2768, %v2770
        %v2776 = vsel %vm1990, %v2772, %v2774
        %v2781 = vadd.f32 %v2715, %v2775
        %v2782 = vadd.f32 %v2716, %v2770
        %v2783 = vadd.f32 %v2717, %v2776
        %v2784 = vadd.f32 %v2718, %v2774
        %2789 = vrot.lane.b32.xlu0 %v2781, 111
        %v2790 = vpop.permute.xlu0 %2789
        %2791 = vrot.lane.b32.xlu0 %v2782, 111
        %v2792 = vpop.permute.xlu0 %2791
        %2793 = vrot.lane.b32.xlu0 %v2783, 111
        %v2794 = vpop.permute.xlu0 %2793
        %2795 = vrot.lane.b32.xlu0 %v2784, 111
        %v2796 = vpop.permute.xlu0 %2795
        %v2797 = vsel %vm2079, %v2790, %v2792
        %v2798 = vsel %vm2079, %v2794, %v2796
        %v2803 = vadd.f32 %v2759, %v2797
        %v2804 = vadd.f32 %v2760, %v2792
        %v2805 = vadd.f32 %v2761, %v2798
        %v2806 = vadd.f32 %v2762, %v2796
        %2811 = vrot.lane.b32.xlu0 %v2649, 94
        %v2812 = vpop.permute.xlu0 %2811
        %2813 = vrot.lane.b32.xlu0 %v2650, 94
        %v2814 = vpop.permute.xlu0 %2813
        %2815 = vrot.lane.b32.xlu0 %v2651, 94
        %v2816 = vpop.permute.xlu0 %2815
        %2817 = vrot.lane.b32.xlu0 %v2652, 94
        %v2818 = vpop.permute.xlu0 %2817
        %v2819 = vsel %vm2168, %v2812, %v2814
        %v2820 = vsel %vm2168, %v2816, %v2818
        %v2825 = vadd.f32 %v2803, %v2819
        %v2826 = vadd.f32 %v2804, %v2814
        %v2827 = vadd.f32 %v2805, %v2820
        %v2828 = vadd.f32 %v2806, %v2818
        %v2829 = vld [vmem:[%s7] sm:$0xff]
        %v2830 = vld [vmem:[%s7 + $0x8] sm:$0xf]
        %2832 = vset.pattern.permute.xlu0 0
        %2833 = vperm.xlu0 %2832, %v2829
        %v2834 = vpop.permute.xlu0 %2833
        %2837 = vset.pattern.permute.xlu0 0
        %2838 = vperm.xlu0 %2837, %v2830
        %v2839 = vpop.permute.xlu0 %2838
        %v2841 = vadd.f32 %v2825, %v2834
        %v2842 = vadd.f32 %v2826, %v2834
        %v2843 = vadd.f32 %v2827, %v2839
        %v2844 = vadd.f32 %v2828, %v2839
        %2845 = vrot.lane.b32.xlu0 %v497, 15
        %v2846 = vpop.permute.xlu0 %2845
        %2847 = vrot.lane.b32.xlu0 %v498, 15
        %v2848 = vpop.permute.xlu0 %2847
        %v2851 = vadd.f32 %v2841, %v2846
        %v2852 = vadd.f32 %v2842, %v2846
        %v2853 = vadd.f32 %v2843, %v2848
        %v2854 = vadd.f32 %v2844, %v2848
        %v2855 = vmax.f32 %v2851, 0.0
        %v2856 = vmax.f32 %v2852, 0.0
        %v2857 = vmax.f32 %v2853, 0.0
        %v2858 = vmax.f32 %v2854, 0.0
        %v2859 = vld [vmem:[%s8] sm:$0xff]
        %v2860 = vld [vmem:[%s9] sm:$0xff]
        %2862 = vset.pattern.permute.xlu0 0
        %2863 = vperm.xlu0 %2862, %v2860
        %v2864 = vpop.permute.xlu0 %2863
        %2870 = vrot.lane.b32.xlu0 %v2855, 113
        %v2871 = vpop.permute.xlu0 %2870
        %2872 = vrot.lane.b32.xlu0 %v2856, 113
        %v2873 = vpop.permute.xlu0 %2872
        %2874 = vrot.lane.b32.xlu0 %v2857, 113
        %v2875 = vpop.permute.xlu0 %2874
        %2876 = vrot.lane.b32.xlu0 %v2858, 113
        %v2877 = vpop.permute.xlu0 %2876
        %v2878 = vsel %vm1990, %v2871, %v2873
        %v2879 = vsel %vm1990, %v2875, %v2877
        %v2882 = vsel %vm805, %v2859, 0
        %vm2884 = vcmask 1043456
        %v2885 = vsel %vm2884, %v2879, 0
        %2887 = vmatprep.subr.mxu0 0.0
        %2888 = vmatpush1.msra.mxu0 %v2878
        %2889 = vmatprep.subr.mxu0 0.0
        %2890 = vmatpush1.msra.mxu0 %v2885
        %2891 = vmatprep.subr.mxu0 0.0
        %2892 = vmatpush1.msra.mxu0 0.0
        %2893 = vmatprep.subr.mxu0 0.0
        %2894 = vmatpush1.msra.mxu0 0.0
        %2895 = vmatprep.subr.mxu0 0.0
        %2896 = vmatpush1.msra.mxu0 0.0
        %2897 = vmatprep.subr.mxu0 0.0
        %2898 = vmatpush1.msra.mxu0 0.0
        %2899 = vmatprep.subr.mxu0 0.0
        %2900 = vmatpush1.msra.mxu0 0.0
        %2901 = vmatprep.subr.mxu0 0.0
        %2902 = vmatpush1.msra.mxu0 0.0
        %2903 = vmatprep.subr.mxu0 0.0
        %2904 = vmatpush1.msra.mxu0 0.0
        %2905 = vmatprep.subr.mxu0 0.0
        %2906 = vmatpush1.msra.mxu0 0.0
        %2907 = vmatprep.subr.mxu0 0.0
        %2908 = vmatpush1.msra.mxu0 0.0
        %2909 = vmatprep.subr.mxu0 0.0
        %2910 = vmatpush1.msra.mxu0 0.0
        %2911 = vmatprep.subr.mxu0 0.0
        %2912 = vmatpush1.msra.mxu0 0.0
        %2913 = vmatprep.subr.mxu0 0.0
        %2914 = vmatpush1.msra.mxu0 0.0
        %2915 = vmatprep.subr.mxu0 0.0
        %2916 = vmatpush1.msra.mxu0 0.0
        %2917 = vmatprep.subr.mxu0 0.0
        %2918 = vmatpush1.msra.mxu0 0.0
        %2919 = vmatprep.subr.mxu0 0.0
        %2920 = vmatpush1.msra.mxu0 0.0
        %2921 = vmatprep.subr.mxu0 0.0
        %2922 = vmatpush1.msra.mxu0 0.0
        %2923 = vmatprep.subr.mxu0 0.0
        %2924 = vmatpush1.msra.mxu0 0.0
        %2925 = vmatprep.subr.mxu0 0.0
        %2926 = vmatpush1.msra.mxu0 0.0
        %2927 = vmatprep.subr.mxu0 0.0
        %2928 = vmatpush1.msra.mxu0 0.0
        %2929 = vmatprep.subr.mxu0 0.0
        %2930 = vmatpush1.msra.mxu0 0.0
        %2931 = vmatprep.subr.mxu0 0.0
        %2932 = vmatpush1.msra.mxu0 0.0
        %2933 = vmatprep.subr.mxu0 0.0
        %2934 = vmatpush1.msra.mxu0 0.0
        %2935 = vmatprep.subr.mxu0 0.0
        %2936 = vmatpush1.msra.mxu0 0.0
        %2937 = vmatprep.subr.mxu0 0.0
        %2938 = vmatpush1.msra.mxu0 0.0
        %2939 = vmatprep.subr.mxu0 0.0
        %2940 = vmatpush1.msra.mxu0 0.0
        %2941 = vmatprep.subr.mxu0 0.0
        %2942 = vmatpush1.msra.mxu0 0.0
        %2943 = vmatprep.subr.mxu0 0.0
        %2944 = vmatpush1.msra.mxu0 0.0
        %2945 = vmatprep.subr.mxu0 0.0
        %2946 = vmatpush1.msra.mxu0 0.0
        %2947 = vmatprep.subr.mxu0 0.0
        %2948 = vmatpush1.msra.mxu0 0.0
        %2949 = vmatprep.subr.mxu0 0.0
        %2950 = vmatpush1.msra.mxu0 0.0
        %2951 = vmatprep.mubr.f32.mxu0 0.0
        %2952 = vmatmul.mubr.f32.gmra.mrb[0].mxu0 %v2882
        %v2953 = vpop.f32.mrb[0].mxu0
        %v2954 = vadd.f32 %v2864, %v2953
        %v2955 = vpop.f32.mrb[0].mxu0
        %2956 = vdwg.mxu0
        %2957 = vst [vmem:[%s456] sm:$0xff] %v2954
        %s2958 = sand.u32 %s289, 1
        %s2959 = scalar_lea.sflag [#allocation3], %s2958
        %s2960 = sand.u32 %s289, 1
        %s2961 = smul.addr %s2960, 8
        %s2962 = scalar_lea.vmem [#allocation2], %s2961
        // Predicated region
        $region61: #{tpu_custom_call.1} parent=59 // pred_check
          %p2963 = pneg %p299
        $region62: #{tpu_custom_call.1} parent=59 // pred_check_branch
          %2965 = sbr.rel (%p2963) target = $region64
        $region63: #{tpu_custom_call.1} parent=59 // pred_region
          %s2967 = ssub.s32 128, 128
          %2968 = vsyncadd %s2959, %s2967
          %s2969 = smul.addr %s28, 2
          %s2970 = sadd.s32 %s29, %s2969
          %s2971 = smul.addr %s2970, 128
          %s2972 = scalar_lea.hbm %s10, %s2971
          %s2974 = sshll.u32 %s2962, 4
          %s2975 = int_to_ptr.vmem [resolvable:$true] %s2974
          %2977 = dma.vmem_to_hbm [thread:$0]  %s2975, 128, %s2972, %s2959
        $region64: #{tpu_custom_call.1} parent=59 // pred_fallthru
          _
      $region60: #{tpu_custom_call.1} parent=5 // pred_fallthru
        _
      %p2978 = scmp.le.s32.totalorder 2, %s19
      // Predicated region
      $region65: #{tpu_custom_call.1} parent=5 // pred_check
        %p2979 = pneg %p2978
      $region66: #{tpu_custom_call.1} parent=5 // pred_check_branch
        %2981 = sbr.rel (%p2979) target = $region68
      $region67: #{tpu_custom_call.1} parent=5 // pred_region
        %s2982 = ssub.s32 %s19, 2
        // Predicated region
        $region69: #{tpu_custom_call.1} parent=67 // pred_check
          %p2983 = pneg %p305
        $region70: #{tpu_custom_call.1} parent=67 // pred_check_branch
          %2985 = sbr.rel (%p2983) target = $region72
        $region71: #{tpu_custom_call.1} parent=67 // pred_region
          %s2986 = sand.u32 %s290, 1
          %s2987 = scalar_lea.sflag [#allocation3], %s2986
          %s2988 = sand.u32 %s290, 1
          %s2989 = smul.addr %s2988, 8
          %s2990 = scalar_lea.vmem [#allocation2], %s2989
          %2991 = dma.done %s2987, 128
        $region72: #{tpu_custom_call.1} parent=67 // pred_fallthru
          _
      $region68: #{tpu_custom_call.1} parent=5 // pred_fallthru
        _
    $region6: #{tpu_custom_call.1} parent=1 // loop_footer
      %s23 = sadd.s32 1, %s19
    $region7: #{tpu_custom_call.1} parent=1 // loop_footer_branch
      %18 = sbr.rel target = $region3
    $region8: #{tpu_custom_call.1} parent=1 // loop_exit
      _
    %2992 = vsyncpa [#allocation3], 1
    %s2993 = scalar_lea.sflag [#allocation3], 1
    %2994 = vsyncpa %s2993, 1

</llo_original>
